<compile_context>
chip_gen: v7x
topology: tpu7x:2x2x1
jax: 0.10.0
libtpu: 0.0.40
codegen_flags: <defaults>
</compile_context>

<pallas_src>
import functools

import jax
import jax.numpy as jnp
from jax.experimental import pallas as pl
from jax.experimental.pallas import tpu as pltpu


def _round_up(v, m):
    return -(-v // m) * m


# ----------------------------- fused Pallas kernel --------------------------

def _make_fused_kernel(nlayers, f_pad, hidden, num_classes, slab_rows):
    """Fused forward for one graph-batch:
       3x GCN layer -> lin1 (single 3H-wide matmul) -> attention pool -> pred_layer -> cls_layer.
       All parameters come from one VMEM slab ref, carved with static slices."""
    H = hidden

    # static row offsets inside the parameter slab
    conv_slices = []
    r = 0
    conv_slices.append((r, r + f_pad)); r += f_pad              # W1  (f_pad, H)
    for _ in range(nlayers - 1):
        conv_slices.append((r, r + H)); r += H                  # Wk  (H, H)
    wl0, wl1 = r, r + nlayers * H; r = wl1                      # Wl  (nlayers*H, H)
    wg0, wg1 = r, r + H; r = wg1                                # Wg  (H, H) col0 valid
    wp0, wp1 = r, r + H; r = wp1                                # Wp  (H, H)
    wc0, wc1 = r, r + H; r = wc1                                # Wc  (H, H) cols[:C] valid
    b_off = r
    n_bias = _round_up(nlayers + 4, 8)                          # bias rows, 8-row aligned
    assert b_off + n_bias == slab_rows

    def kernel(a_ref, x_ref, mask_ref, mask_t_ref, slab_ref, o_ref):
        a = a_ref[...]                          # (N, N) normalized adjacency
        h = x_ref[...]                          # (N, f_pad)
        mask = mask_ref[...]                    # (B, N) graph membership (one-hot rows)
        mask_t = mask_t_ref[...]                # (N, B)
        bias = slab_ref[b_off:b_off + n_bias, :]   # (n_bias, H) — one aligned 8-row load

        # --- GCN layers: relu(A @ (h @ W) + b) ---
        hs = []
        for li, (r0, r1) in enumerate(conv_slices):
            w = slab_ref[r0:r1, :]
            xw = jnp.dot(h, w, preferred_element_type=jnp.float32)
            h = jnp.maximum(
                jnp.dot(a, xw, preferred_element_type=jnp.float32) + bias[li:li + 1, :], 0.0)
            hs.append(h)

        # --- lin1 over the virtual concat: one (N, nlayers*H) @ (nlayers*H, H) matmul ---
        hcat_in = jnp.concatenate(hs, axis=-1)                  # (N, nlayers*H), lane concat
        wl = slab_ref[wl0:wl1, :]
        hcat = jnp.maximum(
            jnp.dot(hcat_in, wl, preferred_element_type=jnp.float32)
            + bias[nlayers:nlayers + 1, :], 0.0)                # (N, H)

        # --- AttentionalAggregation: per-graph softmax over gate logits ---
        wg = slab_ref[wg0:wg1, :][:, 0:1]                       # (H, 1)
        bg = bias[nlayers + 1:nlayers + 2, 0:1]                 # (1, 1)
        g = jnp.dot(hcat, wg, preferred_element_type=jnp.float32) + bg  # (N, 1)

        neg = jnp.float32(-1e30)
        logits_nb = jnp.where(mask_t > 0, g, neg)               # (N, B)
        gmax = jnp.max(logits_nb, axis=0, keepdims=True)        # (1, B) per-graph max
        node_max = jnp.sum(mask_t * gmax, axis=1, keepdims=True)  # (N, 1) max of own graph
        e = jnp.exp(g - node_max)                               # (N, 1)
        num = jnp.dot(mask, e * hcat, preferred_element_type=jnp.float32)  # (B, H)
        den = jnp.dot(mask, e, preferred_element_type=jnp.float32)         # (B, 1)
        pooled = num / jnp.maximum(den, jnp.float32(1e-12))     # guard empty graph

        # --- pred_layer (Linear + ReLU) then cls_layer (Linear) ---
        wp = slab_ref[wp0:wp1, :]
        emb = jnp.maximum(
            jnp.dot(pooled, wp, preferred_element_type=jnp.float32)
            + bias[nlayers + 2:nlayers + 3, :], 0.0)            # (B, H)
        wc = slab_ref[wc0:wc1, :][:, 0:num_classes]             # (H, C)
        bc = bias[nlayers + 3:nlayers + 4, 0:num_classes]       # (1, C)
        o_ref[...] = jnp.dot(emb, wc, preferred_element_type=jnp.float32) + bc

    return kernel


# ----------------------------- parameter packing ----------------------------

def pack_params(params, num_features, f_pad):
    """Stack all weights row-wise (biases as trailing rows) into one (R, H) f32 slab."""
    w1, b1 = params["conv1"]                      # (F, H), (H,)
    H = w1.shape[1]
    blocks = []
    w1p = jnp.zeros((f_pad, H), jnp.float32).at[:num_features, :].set(w1)
    blocks.append(w1p)
    conv_biases = [b1]
    for w, b in params["convs"]:
        blocks.append(w)
        conv_biases.append(b)
    wl, bl = params["lin1"]; blocks.append(wl)                  # (nlayers*H, H)
    wg, bg = params["gate"]
    blocks.append(jnp.zeros((H, H), jnp.float32).at[:, 0:1].set(wg.reshape(H, 1)))
    wp, bp = params["pred"]; blocks.append(wp)
    wc, bc = params["cls"]
    C = wc.shape[1]
    blocks.append(jnp.zeros((H, H), jnp.float32).at[:, :C].set(wc))

    nlayers = len(conv_biases)
    n_bias = _round_up(nlayers + 4, 8)
    bias = jnp.zeros((n_bias, H), jnp.float32)
    for i, b in enumerate(conv_biases):
        bias = bias.at[i, :].set(b)
    bias = bias.at[nlayers, :].set(bl)
    bias = bias.at[nlayers + 1, 0].set(bg[0])
    bias = bias.at[nlayers + 2, :].set(bp)
    bias = bias.at[nlayers + 3, :C].set(bc)
    blocks.append(bias)
    return jnp.concatenate(blocks, axis=0)


# ----------------------------- model glue -----------------------------------

def build_norm_adj(edge_index, num_nodes):
    # GCNConv normalization: A_hat = A with (remaining) self-loops, A_norm = D^{-1/2} A_hat D^{-1/2}
    src, dst = edge_index
    a = jnp.zeros((num_nodes, num_nodes), jnp.float32).at[dst, src].set(1.0)
    a = jnp.maximum(a, jnp.eye(num_nodes, dtype=jnp.float32))
    deg = jnp.sum(a, axis=1)
    dinv = 1.0 / jnp.sqrt(deg)
    return a * dinv[:, None] * dinv[None, :]


def init_params(key, num_features, hidden, nlayers, num_classes):
    def lin(key, fan_in, fan_out):
        k1, k2 = jax.random.split(key)
        s = 1.0 / jnp.sqrt(jnp.float32(fan_in))
        w = jax.random.uniform(k1, (fan_in, fan_out), jnp.float32, -s, s)
        b = jax.random.uniform(k2, (fan_out,), jnp.float32, -s, s)
        return w, b

    keys = jax.random.split(key, 8)
    p = {}
    p["conv1"] = lin(keys[0], num_features, hidden)
    p["convs"] = [lin(keys[1 + i], hidden, hidden) for i in range(nlayers - 1)]
    p["lin1"] = lin(keys[3], nlayers * hidden, hidden)
    p["pred"] = lin(keys[4], hidden, hidden)
    p["cls"] = lin(keys[5], hidden, num_classes)
    p["gate"] = lin(keys[6], hidden, 1)
    return p


@functools.partial(jax.jit, static_argnames=("num_features",))
def gcn_forward(x, a_norm, mask, params, num_features):
    """forward(batch) path (output_emb=False): cls_layer(pred_layer(pool(h, batch)))
       Batched over G independent graph-batches: x (G,N,Fraw), a_norm (G,N,N), mask (G,B,N)."""
    G, N, _ = x.shape
    B = mask.shape[1]
    H = params["conv1"][0].shape[1]
    C = params["cls"][0].shape[1]
    nlayers = 1 + len(params["convs"])
    f_pad = _round_up(num_features, 8)

    xf = x[:, :, :num_features].astype(jnp.float32)
    if f_pad != num_features:
        xf = jnp.pad(xf, ((0, 0), (0, 0), (0, f_pad - num_features)))
    maskf = mask.astype(jnp.float32)
    mask_t = jnp.swapaxes(maskf, 1, 2)                    # (G, N, B)

    slab = pack_params(params, num_features, f_pad)       # (R, H)
    R = slab.shape[0]

    kernel = _make_fused_kernel(nlayers, f_pad, H, C, R)

    return pl.pallas_call(
        kernel,
        out_shape=jax.ShapeDtypeStruct((G, B, C), jnp.float32),
        grid=(G,),
        in_specs=[
            pl.BlockSpec((None, N, N), lambda g: (g, 0, 0)),      # A_norm per batch
            pl.BlockSpec((None, N, f_pad), lambda g: (g, 0, 0)),  # X per batch
            pl.BlockSpec((None, B, N), lambda g: (g, 0, 0)),      # mask per batch
            pl.BlockSpec((None, N, B), lambda g: (g, 0, 0)),      # mask^T per batch
            pl.BlockSpec((R, H), lambda g: (0, 0)),               # params slab (resident)
        ],
        out_specs=pl.BlockSpec((None, B, C), lambda g: (g, 0, 0)),
        compiler_params=pltpu.CompilerParams(
            dimension_semantics=("parallel",)),
    )(a_norm.astype(jnp.float32), xf, maskf, mask_t, slab)


# ----------------------------- main ------------------------------------------

if __name__ == "__main__":
    NUM_BATCHES = 4          # G graph-batches processed by one pallas_call (grid axis)
    NUM_NODES = 24
    RAW_FEATS = 20           # input wider than num_features; forward slices x[:, :num_features]
    NUM_FEATURES = 16
    HIDDEN = 32
    NLAYERS = 3
    NUM_CLASSES = 2
    NUM_GRAPHS = 2
    NODES_PER_GRAPH = NUM_NODES // NUM_GRAPHS

    key = jax.random.PRNGKey(0)
    kx, kp = jax.random.split(key)

    # deterministic node features per graph-batch
    x = jax.random.normal(kx, (NUM_BATCHES, NUM_NODES, RAW_FEATS), dtype=jnp.float32)

    # deterministic graph: two disjoint 12-node rings (bidirectional edges)
    edges = []
    for gidx in range(NUM_GRAPHS):
        off = gidx * NODES_PER_GRAPH
        for i in range(NODES_PER_GRAPH):
            a, b = off + i, off + (i + 1) % NODES_PER_GRAPH
            edges.append((a, b))
            edges.append((b, a))
    edge_index = jnp.asarray(edges, dtype=jnp.int32).T            # (2, E)

    # batch assignment and graph-membership mask (B, N), replicated over graph-batches
    batch_idx = jnp.repeat(jnp.arange(NUM_GRAPHS, dtype=jnp.int32), NODES_PER_GRAPH)
    mask1 = (batch_idx[None, :] ==
             jnp.arange(NUM_GRAPHS, dtype=jnp.int32)[:, None]).astype(jnp.float32)
    mask = jnp.broadcast_to(mask1, (NUM_BATCHES, NUM_GRAPHS, NUM_NODES))

    a1 = build_norm_adj(edge_index, NUM_NODES)
    a_norm = jnp.broadcast_to(a1, (NUM_BATCHES, NUM_NODES, NUM_NODES))

    params = init_params(kp, NUM_FEATURES, HIDDEN, NLAYERS, NUM_CLASSES)

    out = gcn_forward(x, a_norm, mask, params, NUM_FEATURES)
    out = jax.block_until_ready(out)

    assert out.shape == (NUM_BATCHES, NUM_GRAPHS, NUM_CLASSES)
    assert bool(jnp.all(jnp.isfinite(out)))
    print("KERNEL_OK")
</pallas_src>

<mosaic_0001>
module attributes {stable_mosaic.version = 11 : i64} {
  func.func @kernel(%arg0: i32, %arg1: memref<1x24x24xf32, #tpu.memory_space<vmem>>, %arg2: memref<1x24x16xf32, #tpu.memory_space<vmem>>, %arg3: memref<1x2x24xf32, #tpu.memory_space<vmem>>, %arg4: memref<1x24x2xf32, #tpu.memory_space<vmem>>, %arg5: memref<280x32xf32, #tpu.memory_space<vmem>>, %arg6: memref<1x2x2xf32, #tpu.memory_space<vmem>>) attributes {dimension_semantics = [#tpu.dimension_semantics<parallel>], iteration_bounds = array<i64: 4>, scalar_prefetch = 0 : i64, scratch_operands = 0 : i64, tpu.core_type = #tpu.core_type<tc>, window_params = [{transform_indices = @transform_0, window_bounds = array<i64: 1, 24, 24>}, {transform_indices = @transform_1, window_bounds = array<i64: 1, 24, 16>}, {transform_indices = @transform_2, window_bounds = array<i64: 1, 2, 24>}, {transform_indices = @transform_3, window_bounds = array<i64: 1, 24, 2>}, {pipeline_mode = #tpu.pipeline_mode<synchronous>, transform_indices = @transform_4, window_bounds = array<i64: 280, 32>}, {transform_indices = @transform_5, window_bounds = array<i64: 1, 2, 2>}]} {
    %c0 = arith.constant 0 : index
    %c0_0 = arith.constant 0 : index
    %c0_1 = arith.constant 0 : index
    %0 = vector.load %arg1[%c0, %c0_0, %c0_1] : memref<1x24x24xf32, #tpu.memory_space<vmem>>, vector<1x24x24xf32>
    %1 = vector.shape_cast %0 : vector<1x24x24xf32> to vector<24x24xf32>
    %c0_2 = arith.constant 0 : index
    %c0_3 = arith.constant 0 : index
    %c0_4 = arith.constant 0 : index
    %2 = vector.load %arg2[%c0_2, %c0_3, %c0_4] : memref<1x24x16xf32, #tpu.memory_space<vmem>>, vector<1x24x16xf32>
    %3 = vector.shape_cast %2 : vector<1x24x16xf32> to vector<24x16xf32>
    %c0_5 = arith.constant 0 : index
    %c0_6 = arith.constant 0 : index
    %c0_7 = arith.constant 0 : index
    %4 = vector.load %arg3[%c0_5, %c0_6, %c0_7] : memref<1x2x24xf32, #tpu.memory_space<vmem>>, vector<1x2x24xf32>
    %5 = vector.shape_cast %4 : vector<1x2x24xf32> to vector<2x24xf32>
    %c0_8 = arith.constant 0 : index
    %c0_9 = arith.constant 0 : index
    %c0_10 = arith.constant 0 : index
    %6 = vector.load %arg4[%c0_8, %c0_9, %c0_10] : memref<1x24x2xf32, #tpu.memory_space<vmem>>, vector<1x24x2xf32>
    %7 = vector.shape_cast %6 : vector<1x24x2xf32> to vector<24x2xf32>
    %c272 = arith.constant 272 : index
    %c0_11 = arith.constant 0 : index
    %8 = vector.load %arg5[%c272, %c0_11] : memref<280x32xf32, #tpu.memory_space<vmem>>, vector<8x32xf32>
    %c0_12 = arith.constant 0 : index
    %c0_13 = arith.constant 0 : index
    %9 = vector.load %arg5[%c0_12, %c0_13] : memref<280x32xf32, #tpu.memory_space<vmem>>, vector<16x32xf32>
    %cst = arith.constant dense<0.000000e+00> : vector<24x32xf32>
    %10 = tpu.matmul %3, %9, %cst {dimension_numbers = #tpu.dot_dimension_numbers<[1], [0], [0], [1], [0, 0, 1, 1], [], []>} : vector<24x16xf32>, vector<16x32xf32>, vector<24x32xf32> -> vector<24x32xf32>
    %cst_14 = arith.constant dense<0.000000e+00> : vector<24x32xf32>
    %11 = tpu.matmul %1, %10, %cst_14 {dimension_numbers = #tpu.dot_dimension_numbers<[1], [0], [0], [1], [0, 0, 1, 1], [], []>} : vector<24x24xf32>, vector<24x32xf32>, vector<24x32xf32> -> vector<24x32xf32>
    %12 = vector.extract_strided_slice %8 {offsets = [0, 0], sizes = [1, 32], strides = [1, 1]} : vector<8x32xf32> to vector<1x32xf32>
    %13 = vector.broadcast %12 : vector<1x32xf32> to vector<24x32xf32>
    %14 = arith.addf %11, %13 : vector<24x32xf32>
    %cst_15 = arith.constant 0.000000e+00 : f32
    %15 = vector.broadcast %cst_15 : f32 to vector<24x32xf32>
    %16 = arith.maximumf %14, %15 : vector<24x32xf32>
    %c16 = arith.constant 16 : index
    %c0_16 = arith.constant 0 : index
    %17 = vector.load %arg5[%c16, %c0_16] : memref<280x32xf32, #tpu.memory_space<vmem>>, vector<32x32xf32>
    %cst_17 = arith.constant dense<0.000000e+00> : vector<24x32xf32>
    %18 = tpu.matmul %16, %17, %cst_17 {dimension_numbers = #tpu.dot_dimension_numbers<[1], [0], [0], [1], [0, 0, 1, 1], [], []>} : vector<24x32xf32>, vector<32x32xf32>, vector<24x32xf32> -> vector<24x32xf32>
    %cst_18 = arith.constant dense<0.000000e+00> : vector<24x32xf32>
    %19 = tpu.matmul %1, %18, %cst_18 {dimension_numbers = #tpu.dot_dimension_numbers<[1], [0], [0], [1], [0, 0, 1, 1], [], []>} : vector<24x24xf32>, vector<24x32xf32>, vector<24x32xf32> -> vector<24x32xf32>
    %20 = vector.extract_strided_slice %8 {offsets = [1, 0], sizes = [1, 32], strides = [1, 1]} : vector<8x32xf32> to vector<1x32xf32>
    %21 = vector.broadcast %20 : vector<1x32xf32> to vector<24x32xf32>
    %22 = arith.addf %19, %21 : vector<24x32xf32>
    %cst_19 = arith.constant 0.000000e+00 : f32
    %23 = vector.broadcast %cst_19 : f32 to vector<24x32xf32>
    %24 = arith.maximumf %22, %23 : vector<24x32xf32>
    %c48 = arith.constant 48 : index
    %c0_20 = arith.constant 0 : index
    %25 = vector.load %arg5[%c48, %c0_20] : memref<280x32xf32, #tpu.memory_space<vmem>>, vector<32x32xf32>
    %cst_21 = arith.constant dense<0.000000e+00> : vector<24x32xf32>
    %26 = tpu.matmul %24, %25, %cst_21 {dimension_numbers = #tpu.dot_dimension_numbers<[1], [0], [0], [1], [0, 0, 1, 1], [], []>} : vector<24x32xf32>, vector<32x32xf32>, vector<24x32xf32> -> vector<24x32xf32>
    %cst_22 = arith.constant dense<0.000000e+00> : vector<24x32xf32>
    %27 = tpu.matmul %1, %26, %cst_22 {dimension_numbers = #tpu.dot_dimension_numbers<[1], [0], [0], [1], [0, 0, 1, 1], [], []>} : vector<24x24xf32>, vector<24x32xf32>, vector<24x32xf32> -> vector<24x32xf32>
    %28 = vector.extract_strided_slice %8 {offsets = [2, 0], sizes = [1, 32], strides = [1, 1]} : vector<8x32xf32> to vector<1x32xf32>
    %29 = vector.broadcast %28 : vector<1x32xf32> to vector<24x32xf32>
    %30 = arith.addf %27, %29 : vector<24x32xf32>
    %cst_23 = arith.constant 0.000000e+00 : f32
    %31 = vector.broadcast %cst_23 : f32 to vector<24x32xf32>
    %32 = arith.maximumf %30, %31 : vector<24x32xf32>
    %33 = tpu.concatenate %16, %24, %32 in 1 : vector<24x32xf32>, vector<24x32xf32>, vector<24x32xf32> -> vector<24x96xf32>
    %c80 = arith.constant 80 : index
    %c0_24 = arith.constant 0 : index
    %34 = vector.load %arg5[%c80, %c0_24] : memref<280x32xf32, #tpu.memory_space<vmem>>, vector<96x32xf32>
    %cst_25 = arith.constant dense<0.000000e+00> : vector<24x32xf32>
    %35 = tpu.matmul %33, %34, %cst_25 {dimension_numbers = #tpu.dot_dimension_numbers<[1], [0], [0], [1], [0, 0, 1, 1], [], []>} : vector<24x96xf32>, vector<96x32xf32>, vector<24x32xf32> -> vector<24x32xf32>
    %36 = vector.extract_strided_slice %8 {offsets = [3, 0], sizes = [1, 32], strides = [1, 1]} : vector<8x32xf32> to vector<1x32xf32>
    %37 = vector.broadcast %36 : vector<1x32xf32> to vector<24x32xf32>
    %38 = arith.addf %35, %37 : vector<24x32xf32>
    %cst_26 = arith.constant 0.000000e+00 : f32
    %39 = vector.broadcast %cst_26 : f32 to vector<24x32xf32>
    %40 = arith.maximumf %38, %39 : vector<24x32xf32>
    %c176 = arith.constant 176 : index
    %c0_27 = arith.constant 0 : index
    %41 = vector.load %arg5[%c176, %c0_27] : memref<280x32xf32, #tpu.memory_space<vmem>>, vector<32x32xf32>
    %42 = vector.extract_strided_slice %41 {offsets = [0, 0], sizes = [32, 1], strides = [1, 1]} : vector<32x32xf32> to vector<32x1xf32>
    %43 = vector.extract_strided_slice %8 {offsets = [4, 0], sizes = [1, 1], strides = [1, 1]} : vector<8x32xf32> to vector<1x1xf32>
    %cst_28 = arith.constant dense<0.000000e+00> : vector<24x1xf32>
    %44 = tpu.matmul %40, %42, %cst_28 {dimension_numbers = #tpu.dot_dimension_numbers<[1], [0], [0], [1], [0, 0, 1, 1], [], []>} : vector<24x32xf32>, vector<32x1xf32>, vector<24x1xf32> -> vector<24x1xf32>
    %45 = vector.broadcast %43 : vector<1x1xf32> to vector<24x1xf32>
    %46 = arith.addf %44, %45 : vector<24x1xf32>
    %cst_29 = arith.constant 0.000000e+00 : f32
    %47 = vector.broadcast %cst_29 : f32 to vector<24x2xf32>
    %48 = arith.cmpf ogt, %7, %47 : vector<24x2xf32>
    %cst_30 = arith.constant -1.000000e+30 : f32
    %49 = vector.shape_cast %46 : vector<24x1xf32> to vector<24x1xf32>
    %50 = vector.broadcast %49 : vector<24x1xf32> to vector<24x2xf32>
    %51 = vector.broadcast %cst_30 : f32 to vector<24x2xf32>
    %52 = arith.select %48, %50, %51 : vector<24x2xi1>, vector<24x2xf32>
    %cst_31 = arith.constant dense<0xFF800000> : vector<2xf32>
    %53 = vector.multi_reduction <maximumf>, %52, %cst_31 [0] : vector<24x2xf32> to vector<2xf32>
    %54 = vector.shape_cast %53 : vector<2xf32> to vector<1x2xf32>
    %55 = vector.broadcast %54 : vector<1x2xf32> to vector<24x2xf32>
    %56 = arith.mulf %7, %55 : vector<24x2xf32>
    %cst_32 = arith.constant dense<0.000000e+00> : vector<24xf32>
    %57 = vector.multi_reduction <add>, %56, %cst_32 [1] : vector<24x2xf32> to vector<24xf32>
    %58 = vector.shape_cast %57 : vector<24xf32> to vector<24x1xf32>
    %59 = arith.subf %46, %58 : vector<24x1xf32>
    %60 = math.exp %59 : vector<24x1xf32>
    %61 = vector.broadcast %60 : vector<24x1xf32> to vector<24x32xf32>
    %62 = arith.mulf %61, %40 : vector<24x32xf32>
    %cst_33 = arith.constant dense<0.000000e+00> : vector<2x32xf32>
    %63 = tpu.matmul %5, %62, %cst_33 {dimension_numbers = #tpu.dot_dimension_numbers<[1], [0], [0], [1], [0, 0, 1, 1], [], []>} : vector<2x24xf32>, vector<24x32xf32>, vector<2x32xf32> -> vector<2x32xf32>
    %cst_34 = arith.constant dense<0.000000e+00> : vector<2x1xf32>
    %64 = tpu.matmul %5, %60, %cst_34 {dimension_numbers = #tpu.dot_dimension_numbers<[1], [0], [0], [1], [0, 0, 1, 1], [], []>} : vector<2x24xf32>, vector<24x1xf32>, vector<2x1xf32> -> vector<2x1xf32>
    %cst_35 = arith.constant 9.99999996E-13 : f32
    %65 = vector.broadcast %cst_35 : f32 to vector<2x1xf32>
    %66 = arith.maximumf %64, %65 : vector<2x1xf32>
    %67 = vector.broadcast %66 : vector<2x1xf32> to vector<2x32xf32>
    %68 = arith.divf %63, %67 : vector<2x32xf32>
    %c208 = arith.constant 208 : index
    %c0_36 = arith.constant 0 : index
    %69 = vector.load %arg5[%c208, %c0_36] : memref<280x32xf32, #tpu.memory_space<vmem>>, vector<32x32xf32>
    %cst_37 = arith.constant dense<0.000000e+00> : vector<2x32xf32>
    %70 = tpu.matmul %68, %69, %cst_37 {dimension_numbers = #tpu.dot_dimension_numbers<[1], [0], [0], [1], [0, 0, 1, 1], [], []>} : vector<2x32xf32>, vector<32x32xf32>, vector<2x32xf32> -> vector<2x32xf32>
    %71 = vector.extract_strided_slice %8 {offsets = [5, 0], sizes = [1, 32], strides = [1, 1]} : vector<8x32xf32> to vector<1x32xf32>
    %72 = vector.broadcast %71 : vector<1x32xf32> to vector<2x32xf32>
    %73 = arith.addf %70, %72 : vector<2x32xf32>
    %cst_38 = arith.constant 0.000000e+00 : f32
    %74 = vector.broadcast %cst_38 : f32 to vector<2x32xf32>
    %75 = arith.maximumf %73, %74 : vector<2x32xf32>
    %c240 = arith.constant 240 : index
    %c0_39 = arith.constant 0 : index
    %76 = vector.load %arg5[%c240, %c0_39] : memref<280x32xf32, #tpu.memory_space<vmem>>, vector<32x32xf32>
    %77 = vector.extract_strided_slice %76 {offsets = [0, 0], sizes = [32, 2], strides = [1, 1]} : vector<32x32xf32> to vector<32x2xf32>
    %78 = vector.extract_strided_slice %8 {offsets = [6, 0], sizes = [1, 2], strides = [1, 1]} : vector<8x32xf32> to vector<1x2xf32>
    %cst_40 = arith.constant dense<0.000000e+00> : vector<2x2xf32>
    %79 = tpu.matmul %75, %77, %cst_40 {dimension_numbers = #tpu.dot_dimension_numbers<[1], [0], [0], [1], [0, 0, 1, 1], [], []>} : vector<2x32xf32>, vector<32x2xf32>, vector<2x2xf32> -> vector<2x2xf32>
    %80 = vector.broadcast %78 : vector<1x2xf32> to vector<2x2xf32>
    %81 = arith.addf %79, %80 : vector<2x2xf32>
    %c0_41 = arith.constant 0 : index
    %c0_42 = arith.constant 0 : index
    %c0_43 = arith.constant 0 : index
    %82 = vector.load %arg6[%c0_41, %c0_42, %c0_43] : memref<1x2x2xf32, #tpu.memory_space<vmem>>, vector<1x2x2xf32>
    %83 = vector.shape_cast %82 : vector<1x2x2xf32> to vector<2x2xf32>
    %84 = vector.shape_cast %81 : vector<2x2xf32> to vector<1x2x2xf32>
    tpu.vector_store %arg6[%c0_41, %c0_42, %c0_43], %84 {strides = array<i32>} : memref<1x2x2xf32, #tpu.memory_space<vmem>>, vector<1x2x2xf32>,
    return
  }
  func.func @transform_0(%arg0: i32) -> (i32, i32, i32) {
    %c0_i32 = arith.constant 0 : i32
    %c0_i32_0 = arith.constant 0 : i32
    %c0_i32_1 = arith.constant 0 : i32
    return %arg0, %c0_i32, %c0_i32_0 : i32, i32, i32
  }
  func.func @transform_1(%arg0: i32) -> (i32, i32, i32) {
    %c0_i32 = arith.constant 0 : i32
    %c0_i32_0 = arith.constant 0 : i32
    %c0_i32_1 = arith.constant 0 : i32
    return %arg0, %c0_i32, %c0_i32_0 : i32, i32, i32
  }
  func.func @transform_2(%arg0: i32) -> (i32, i32, i32) {
    %c0_i32 = arith.constant 0 : i32
    %c0_i32_0 = arith.constant 0 : i32
    %c0_i32_1 = arith.constant 0 : i32
    return %arg0, %c0_i32, %c0_i32_0 : i32, i32, i32
  }
  func.func @transform_3(%arg0: i32) -> (i32, i32, i32) {
    %c0_i32 = arith.constant 0 : i32
    %c0_i32_0 = arith.constant 0 : i32
    %c0_i32_1 = arith.constant 0 : i32
    return %arg0, %c0_i32, %c0_i32_0 : i32, i32, i32
  }
  func.func @transform_4(%arg0: i32) -> (i32, i32) {
    %c0_i32 = arith.constant 0 : i32
    %c0_i32_0 = arith.constant 0 : i32
    %c0_i32_1 = arith.constant 0 : i32
    return %c0_i32, %c0_i32_0 : i32, i32
  }
  func.func @transform_5(%arg0: i32) -> (i32, i32, i32) {
    %c0_i32 = arith.constant 0 : i32
    %c0_i32_0 = arith.constant 0 : i32
    %c0_i32_1 = arith.constant 0 : i32
    return %arg0, %c0_i32, %c0_i32_0 : i32, i32, i32
  }
}

</mosaic_0001>

<llo_original>
// kernel: gcn_forward.1
$region0: #{gcn_forward.1}
  #allocation0 [shape = 'u32[]', space=smem, size = 0x4, offset = 0x4, fixed_abs, tag = 'smem constant byte address 0x4 - core index']
  #allocation1 [shape = 'u32[144,128]{1,0:T(1,128)}', space=vmem, size = 0x12000, scoped, tag = 'internal scratch']
  %s0 = inlined_call_operand.vmem [shape: f32[4,24,24], index: 0, kind: input, shape index: {}]
  %s1 = inlined_call_operand.vmem [shape: f32[4,24,16], index: 1, kind: input, shape index: {}]
  %s2 = inlined_call_operand.vmem [shape: f32[4,2,24], index: 2, kind: input, shape index: {}]
  %s3 = inlined_call_operand.vmem [shape: f32[4,24,2], index: 3, kind: input, shape index: {}]
  %s4 = inlined_call_operand.vmem [shape: f32[280,32], index: 4, kind: input, shape index: {}]
  %s5 = inlined_call_operand.vmem [shape: f32[4,2,2], index: 5, kind: output, shape index: {}]
  %s6 = sld [smem:[#allocation0]]
  $region53: #{gcn_forward.1} parent=0
    _
  %s8 = ssub.s32 1, %s6
  %s9 = scalar_select 0, %s8, %s6
  loop: start=0, step=1, limit=6
  $region2: #{gcn_forward.1} parent=0 // loop_pre_header
    _
  $region3: #{gcn_forward.1} parent=0 // loop_header
    %s11 = sphi 0, %s15
    %p12 = scmp.ge.s32.totalorder %s11, 6
    %s21 = sphi 0, %s23
    %s24 = sphi 0, %s21
    %s25 = sphi 0, %s24
    %s41 = sphi 0, %s25
    %s47 = sphi 0, %s49
    %s50 = sphi 0, %s47
    %s51 = sphi 0, %s50
    %s67 = sphi 0, %s51
    %s73 = sphi 0, %s75
    %s76 = sphi 0, %s73
    %s77 = sphi 0, %s76
    %s93 = sphi 0, %s77
    %s99 = sphi 0, %s101
    %s102 = sphi 0, %s99
    %s103 = sphi 0, %s102
    %s119 = sphi 0, %s103
    %s123 = sphi 0, %s123
    %s125 = sphi 0, %s123
    %s126 = sphi 0, %s125
    %s140 = sphi 0, %s126
    %s146 = sphi 0, %s148
    %s149 = sphi 0, %s146
    %s150 = sphi 0, %s149
    %s166 = sphi 0, %s150
  $region4: #{gcn_forward.1} parent=0 // loop_header_branch
    %14 = sbr.rel (%p12) target = $region8
  $region5: #{gcn_forward.1} parent=0 // loop_body
    %s16 = ssub.s32 %s11, 1
    %s17 = ssub.s32 %s11, 2
    %s18 = sadd.s32 %s11, 1
    %s19 = ssub.s32 %s11, %s18
    %p20 = scmp.eq.s32.totalorder %s19, 0
    %s22 = sadd.s32 %s21, 1
    %s23 = scalar_select %p20, %s21, %s22
    %p26 = pneg %p20
    %p27 = scmp.eq.s32.totalorder %s11, 3
    %p28 = por %p26, %p27
    %p29 = scmp.ne.s32.totalorder %s21, %s24
    %p30 = scmp.eq.s32.totalorder %s11, 0
    %p31 = por %p29, %p30
    %p32 = scmp.ne.s32.totalorder %s21, %s24
    %p33 = scmp.eq.s32.totalorder %s16, 3
    %p34 = por %p32, %p33
    %p35 = scmp.ne.s32.totalorder %s24, %s25
    %p36 = scmp.eq.s32.totalorder %s16, 0
    %p37 = por %p35, %p36
    %p38 = scmp.ne.s32.totalorder %s24, %s25
    %p39 = scmp.eq.s32.totalorder %s17, 3
    %p40 = por %p38, %p39
    %p42 = scmp.ne.s32.totalorder %s25, %s41
    %p43 = scmp.eq.s32.totalorder %s17, 0
    %p44 = por %p42, %p43
    %s45 = ssub.s32 %s11, %s18
    %p46 = scmp.eq.s32.totalorder %s45, 0
    %s48 = sadd.s32 %s47, 1
    %s49 = scalar_select %p46, %s47, %s48
    %p52 = pneg %p46
    %p53 = scmp.eq.s32.totalorder %s11, 3
    %p54 = por %p52, %p53
    %p55 = scmp.ne.s32.totalorder %s47, %s50
    %p56 = scmp.eq.s32.totalorder %s11, 0
    %p57 = por %p55, %p56
    %p58 = scmp.ne.s32.totalorder %s47, %s50
    %p59 = scmp.eq.s32.totalorder %s16, 3
    %p60 = por %p58, %p59
    %p61 = scmp.ne.s32.totalorder %s50, %s51
    %p62 = scmp.eq.s32.totalorder %s16, 0
    %p63 = por %p61, %p62
    %p64 = scmp.ne.s32.totalorder %s50, %s51
    %p65 = scmp.eq.s32.totalorder %s17, 3
    %p66 = por %p64, %p65
    %p68 = scmp.ne.s32.totalorder %s51, %s67
    %p69 = scmp.eq.s32.totalorder %s17, 0
    %p70 = por %p68, %p69
    %s71 = ssub.s32 %s11, %s18
    %p72 = scmp.eq.s32.totalorder %s71, 0
    %s74 = sadd.s32 %s73, 1
    %s75 = scalar_select %p72, %s73, %s74
    %p78 = pneg %p72
    %p79 = scmp.eq.s32.totalorder %s11, 3
    %p80 = por %p78, %p79
    %p81 = scmp.ne.s32.totalorder %s73, %s76
    %p82 = scmp.eq.s32.totalorder %s11, 0
    %p83 = por %p81, %p82
    %p84 = scmp.ne.s32.totalorder %s73, %s76
    %p85 = scmp.eq.s32.totalorder %s16, 3
    %p86 = por %p84, %p85
    %p87 = scmp.ne.s32.totalorder %s76, %s77
    %p88 = scmp.eq.s32.totalorder %s16, 0
    %p89 = por %p87, %p88
    %p90 = scmp.ne.s32.totalorder %s76, %s77
    %p91 = scmp.eq.s32.totalorder %s17, 3
    %p92 = por %p90, %p91
    %p94 = scmp.ne.s32.totalorder %s77, %s93
    %p95 = scmp.eq.s32.totalorder %s17, 0
    %p96 = por %p94, %p95
    %s97 = ssub.s32 %s11, %s18
    %p98 = scmp.eq.s32.totalorder %s97, 0
    %s100 = sadd.s32 %s99, 1
    %s101 = scalar_select %p98, %s99, %s100
    %p104 = pneg %p98
    %p105 = scmp.eq.s32.totalorder %s11, 3
    %p106 = por %p104, %p105
    %p107 = scmp.ne.s32.totalorder %s99, %s102
    %p108 = scmp.eq.s32.totalorder %s11, 0
    %p109 = por %p107, %p108
    %p110 = scmp.ne.s32.totalorder %s99, %s102
    %p111 = scmp.eq.s32.totalorder %s16, 3
    %p112 = por %p110, %p111
    %p113 = scmp.ne.s32.totalorder %s102, %s103
    %p114 = scmp.eq.s32.totalorder %s16, 0
    %p115 = por %p113, %p114
    %p116 = scmp.ne.s32.totalorder %s102, %s103
    %p117 = scmp.eq.s32.totalorder %s17, 3
    %p118 = por %p116, %p117
    %p120 = scmp.ne.s32.totalorder %s103, %s119
    %p121 = scmp.eq.s32.totalorder %s17, 0
    %p122 = por %p120, %p121
    %s124 = sadd.s32 %s123, 1
    %p127 = scmp.eq.s32.totalorder %s11, 3
    %p128 = scmp.ne.s32.totalorder %s123, %s125
    %p129 = scmp.eq.s32.totalorder %s11, 0
    %p130 = por %p128, %p129
    %p131 = scmp.ne.s32.totalorder %s123, %s125
    %p132 = scmp.eq.s32.totalorder %s16, 3
    %p133 = por %p131, %p132
    %p134 = scmp.ne.s32.totalorder %s125, %s126
    %p135 = scmp.eq.s32.totalorder %s16, 0
    %p136 = por %p134, %p135
    %p137 = scmp.ne.s32.totalorder %s125, %s126
    %p138 = scmp.eq.s32.totalorder %s17, 3
    %p139 = por %p137, %p138
    %p141 = scmp.ne.s32.totalorder %s126, %s140
    %p142 = scmp.eq.s32.totalorder %s17, 0
    %p143 = por %p141, %p142
    %s144 = ssub.s32 %s11, %s18
    %p145 = scmp.eq.s32.totalorder %s144, 0
    %s147 = sadd.s32 %s146, 1
    %s148 = scalar_select %p145, %s146, %s147
    %p151 = pneg %p145
    %p152 = scmp.eq.s32.totalorder %s11, 3
    %p153 = por %p151, %p152
    %p154 = scmp.ne.s32.totalorder %s146, %s149
    %p155 = scmp.eq.s32.totalorder %s11, 0
    %p156 = por %p154, %p155
    %p157 = scmp.ne.s32.totalorder %s146, %s149
    %p158 = scmp.eq.s32.totalorder %s16, 3
    %p159 = por %p157, %p158
    %p160 = scmp.ne.s32.totalorder %s149, %s150
    %p161 = scmp.eq.s32.totalorder %s16, 0
    %p162 = por %p160, %p161
    %p163 = scmp.ne.s32.totalorder %s149, %s150
    %p164 = scmp.eq.s32.totalorder %s17, 3
    %p165 = por %p163, %p164
    %p167 = scmp.ne.s32.totalorder %s150, %s166
    %p168 = scmp.eq.s32.totalorder %s17, 0
    %p169 = por %p167, %p168
    %p170 = scmp.le.s32.totalorder 1, %s11
    %p171 = scmp.lt.s32.totalorder %s11, 5
    %p172 = pnand %p170, %p171
    %p173 = pneg %p172
    // Predicated region
    $region9: #{gcn_forward.1} parent=5 // pred_check
      _
    $region10: #{gcn_forward.1} parent=5 // pred_check_branch
      %175 = sbr.rel (%p172) target = $region12
    $region11: #{gcn_forward.1} parent=5 // pred_region
      %s176 = ssub.s32 %s11, 1
      // Predicated region
      $region13: #{gcn_forward.1} parent=11 // pred_check
        %p177 = pneg %p136
      $region14: #{gcn_forward.1} parent=11 // pred_check_branch
        %179 = sbr.rel (%p177) target = $region16
      $region15: #{gcn_forward.1} parent=11 // pred_region
        _
      $region16: #{gcn_forward.1} parent=11 // pred_fallthru
        _
    $region12: #{gcn_forward.1} parent=5 // pred_fallthru
      _
    %p180 = scmp.lt.s32.totalorder %s11, 4
    // Predicated region
    $region17: #{gcn_forward.1} parent=5 // pred_check
      %p181 = pneg %p180
    $region18: #{gcn_forward.1} parent=5 // pred_check_branch
      %183 = sbr.rel (%p181) target = $region20
    $region19: #{gcn_forward.1} parent=5 // pred_region
      // Predicated region
      $region21: #{gcn_forward.1} parent=19 // pred_check
        %p184 = pneg %p31
      $region22: #{gcn_forward.1} parent=19 // pred_check_branch
        %186 = sbr.rel (%p184) target = $region24
      $region23: #{gcn_forward.1} parent=19 // pred_region
        %p187 = scmp.lt.s32.totalorder %s11, 3
        %s188 = scalar_select %p187, %s11, 3
        %s189 = smul.addr %s188, 3
        %s190 = smul.addr %s189, 8
        %s191 = scalar_lea.vmem %s0, %s190
      $region24: #{gcn_forward.1} parent=19 // pred_fallthru
        _
      // Predicated region
      $region25: #{gcn_forward.1} parent=19 // pred_check
        %p192 = pneg %p57
      $region26: #{gcn_forward.1} parent=19 // pred_check_branch
        %194 = sbr.rel (%p192) target = $region28
      $region27: #{gcn_forward.1} parent=19 // pred_region
        %p195 = scmp.lt.s32.totalorder %s11, 3
        %s196 = scalar_select %p195, %s11, 3
        %s197 = smul.addr %s196, 3
        %s198 = smul.addr %s197, 8
        %s199 = scalar_lea.vmem %s1, %s198
      $region28: #{gcn_forward.1} parent=19 // pred_fallthru
        _
      // Predicated region
      $region29: #{gcn_forward.1} parent=19 // pred_check
        %p200 = pneg %p83
      $region30: #{gcn_forward.1} parent=19 // pred_check_branch
        %202 = sbr.rel (%p200) target = $region32
      $region31: #{gcn_forward.1} parent=19 // pred_region
        %p203 = scmp.lt.s32.totalorder %s11, 3
        %s204 = scalar_select %p203, %s11, 3
        %s205 = smul.addr %s204, 2
        %s206 = scalar_lea.vmem %s2, %s205
      $region32: #{gcn_forward.1} parent=19 // pred_fallthru
        _
      // Predicated region
      $region33: #{gcn_forward.1} parent=19 // pred_check
        %p207 = pneg %p109
      $region34: #{gcn_forward.1} parent=19 // pred_check_branch
        %209 = sbr.rel (%p207) target = $region36
      $region35: #{gcn_forward.1} parent=19 // pred_region
        %p210 = scmp.lt.s32.totalorder %s11, 3
        %s211 = scalar_select %p210, %s11, 3
        %s212 = smul.addr %s211, 3
        %s213 = smul.addr %s212, 8
        %s214 = scalar_lea.vmem %s3, %s213
      $region36: #{gcn_forward.1} parent=19 // pred_fallthru
        _
    $region20: #{gcn_forward.1} parent=5 // pred_fallthru
      _
    %p215 = scmp.le.s32.totalorder 1, %s11
    %p216 = scmp.lt.s32.totalorder %s11, 5
    %p217 = pnand %p215, %p216
    %p218 = pneg %p217
    // Predicated region
    $region37: #{gcn_forward.1} parent=5 // pred_check
      _
    $region38: #{gcn_forward.1} parent=5 // pred_check_branch
      %220 = sbr.rel (%p217) target = $region40
    $region39: #{gcn_forward.1} parent=5 // pred_region
      %s221 = ssub.s32 %s11, 1
      %p222 = scmp.lt.s32.totalorder %s16, 3
      %s223 = scalar_select %p222, %s16, 3
      %s224 = smul.addr %s223, 3
      %s225 = smul.addr %s224, 8
      %s226 = scalar_lea.vmem %s0, %s225
      %p227 = pneg %p37
      %p228 = pneg %p34
      %p229 = scmp.lt.s32.totalorder %s16, 3
      %s230 = scalar_select %p229, %s16, 3
      %s231 = smul.addr %s230, 3
      %s232 = smul.addr %s231, 8
      %s233 = scalar_lea.vmem %s1, %s232
      %p234 = pneg %p63
      %p235 = pneg %p60
      %p236 = scmp.lt.s32.totalorder %s16, 3
      %s237 = scalar_select %p236, %s16, 3
      %s238 = smul.addr %s237, 2
      %s239 = scalar_lea.vmem %s2, %s238
      %p240 = pneg %p89
      %p241 = pneg %p86
      %p242 = scmp.lt.s32.totalorder %s16, 3
      %s243 = scalar_select %p242, %s16, 3
      %s244 = smul.addr %s243, 3
      %s245 = smul.addr %s244, 8
      %s246 = scalar_lea.vmem %s3, %s245
      %p247 = pneg %p115
      %p248 = pneg %p112
      %p249 = pneg %p136
      %p250 = pneg %p133
      %p251 = pneg %p162
      %p252 = pneg %p159
      %p253 = scmp.lt.s32.totalorder %s16, 3
      %s254 = scalar_select %p253, %s16, 3
      %s255 = smul.addr %s254, 2
      %s256 = scalar_lea.vmem %s5, %s255
      %p257 = scmp.lt.s32.totalorder %s16, 3
      %s258 = scalar_select %p257, %s16, 3
      %s259 = smul.addr %s258, 3
      %s260 = smul.addr %s259, 8
      %s261 = scalar_lea.vmem %s0, %s260
      %p262 = scmp.lt.s32.totalorder %s16, 3
      %s263 = scalar_select %p262, %s16, 3
      %s264 = smul.addr %s263, 3
      %s265 = smul.addr %s264, 8
      %s266 = scalar_lea.vmem %s1, %s265
      %p267 = scmp.lt.s32.totalorder %s16, 3
      %s268 = scalar_select %p267, %s16, 3
      %s269 = smul.addr %s268, 2
      %s270 = scalar_lea.vmem %s2, %s269
      %p271 = scmp.lt.s32.totalorder %s16, 3
      %s272 = scalar_select %p271, %s16, 3
      %s273 = smul.addr %s272, 3
      %s274 = smul.addr %s273, 8
      %s275 = scalar_lea.vmem %s3, %s274
      %p276 = scmp.lt.s32.totalorder %s16, 3
      %s277 = scalar_select %p276, %s16, 3
      %s278 = smul.addr %s277, 2
      %s279 = scalar_lea.vmem %s5, %s278
      %v280 = vld [vmem:[%s261] sm:$0xff]
      %v281 = vld [vmem:[%s261 + $0x8] sm:$0xff]
      %v282 = vld [vmem:[%s261 + $0x10] sm:$0xff]
      %v283 = vld [vmem:[%s266] sm:$0xff]
      %v284 = vld [vmem:[%s266 + $0x8] sm:$0xff]
      %v285 = vld [vmem:[%s266 + $0x10] sm:$0xff]
      %v286 = vld [vmem:[%s270] sm:$0x3]
      %v287 = vld [vmem:[%s275] sm:$0xff]
      %v288 = vld [vmem:[%s275 + $0x8] sm:$0xff]
      %v289 = vld [vmem:[%s275 + $0x10] sm:$0xff]
      %v290 = vld [vmem:[%s4 + $0x110] sm:$0xff]
      %v291 = vld [vmem:[%s4] sm:$0xff]
      %v292 = vld [vmem:[%s4 + $0x8] sm:$0xff]
      %vm293 = vcmask 130048
      %v295 = vsel %vm293, %v283, 0
      %v298 = vsel %vm293, %v284, 0
      %v301 = vsel %vm293, %v285, 0
      %303 = vmatprep.subr.mxu0 0.0
      %304 = vmatpush1.msra.mxu0 %v291
      %305 = vmatprep.subr.mxu0 0.0
      %306 = vmatpush1.msra.mxu0 %v292
      %307 = vmatprep.subr.mxu0 0.0
      %308 = vmatpush1.msra.mxu0 0.0
      %309 = vmatprep.subr.mxu0 0.0
      %310 = vmatpush1.msra.mxu0 0.0
      %311 = vmatprep.subr.mxu0 0.0
      %312 = vmatpush1.msra.mxu0 0.0
      %313 = vmatprep.subr.mxu0 0.0
      %314 = vmatpush1.msra.mxu0 0.0
      %315 = vmatprep.subr.mxu0 0.0
      %316 = vmatpush1.msra.mxu0 0.0
      %317 = vmatprep.subr.mxu0 0.0
      %318 = vmatpush1.msra.mxu0 0.0
      %319 = vmatprep.subr.mxu0 0.0
      %320 = vmatpush1.msra.mxu0 0.0
      %321 = vmatprep.subr.mxu0 0.0
      %322 = vmatpush1.msra.mxu0 0.0
      %323 = vmatprep.subr.mxu0 0.0
      %324 = vmatpush1.msra.mxu0 0.0
      %325 = vmatprep.subr.mxu0 0.0
      %326 = vmatpush1.msra.mxu0 0.0
      %327 = vmatprep.subr.mxu0 0.0
      %328 = vmatpush1.msra.mxu0 0.0
      %329 = vmatprep.subr.mxu0 0.0
      %330 = vmatpush1.msra.mxu0 0.0
      %331 = vmatprep.subr.mxu0 0.0
      %332 = vmatpush1.msra.mxu0 0.0
      %333 = vmatprep.subr.mxu0 0.0
      %334 = vmatpush1.msra.mxu0 0.0
      %335 = vmatprep.subr.mxu0 0.0
      %336 = vmatpush1.msra.mxu0 0.0
      %337 = vmatprep.subr.mxu0 0.0
      %338 = vmatpush1.msra.mxu0 0.0
      %339 = vmatprep.subr.mxu0 0.0
      %340 = vmatpush1.msra.mxu0 0.0
      %341 = vmatprep.subr.mxu0 0.0
      %342 = vmatpush1.msra.mxu0 0.0
      %343 = vmatprep.subr.mxu0 0.0
      %344 = vmatpush1.msra.mxu0 0.0
      %345 = vmatprep.subr.mxu0 0.0
      %346 = vmatpush1.msra.mxu0 0.0
      %347 = vmatprep.subr.mxu0 0.0
      %348 = vmatpush1.msra.mxu0 0.0
      %349 = vmatprep.subr.mxu0 0.0
      %350 = vmatpush1.msra.mxu0 0.0
      %351 = vmatprep.subr.mxu0 0.0
      %352 = vmatpush1.msra.mxu0 0.0
      %353 = vmatprep.subr.mxu0 0.0
      %354 = vmatpush1.msra.mxu0 0.0
      %355 = vmatprep.subr.mxu0 0.0
      %356 = vmatpush1.msra.mxu0 0.0
      %357 = vmatprep.subr.mxu0 0.0
      %358 = vmatpush1.msra.mxu0 0.0
      %359 = vmatprep.subr.mxu0 0.0
      %360 = vmatpush1.msra.mxu0 0.0
      %361 = vmatprep.subr.mxu0 0.0
      %362 = vmatpush1.msra.mxu0 0.0
      %363 = vmatprep.subr.mxu0 0.0
      %364 = vmatpush1.msra.mxu0 0.0
      %365 = vmatprep.subr.mxu0 0.0
      %366 = vmatpush1.msra.mxu0 0.0
      %367 = vmatprep.mubr.f32.mxu0 0.0
      %368 = vmatmul.mubr.f32.gmra.mrb[0].mxu0 %v295
      %v369 = vpop.f32.mrb[0].mxu0
      %v370 = vadd.f32 0.0, %v369
      %v371 = vpop.f32.mrb[0].mxu0
      %372 = vmatprep.mubr.f32.mxu0 0.0
      %373 = vmatmul.mubr.f32.gmra.mrb[0].mxu0 %v298
      %v374 = vpop.f32.mrb[0].mxu0
      %v375 = vadd.f32 0.0, %v374
      %v376 = vpop.f32.mrb[0].mxu0
      %377 = vmatprep.mubr.f32.mxu0 0.0
      %378 = vmatmul.mubr.f32.gmra.mrb[0].mxu0 %v301
      %v379 = vpop.f32.mrb[0].mxu0
      %v380 = vadd.f32 0.0, %v379
      %v381 = vpop.f32.mrb[0].mxu0
      %382 = vdwg.mxu0
      %v383 = vlaneseq
      %v384 = vshrl.u32 %v383, 7
      %v385 = vsub.s32 0, %v384
      %v386 = vrot.slane %v290, %v385
      %vm387 = vcmask 195584
      %v389 = vsel %vm387, %v280, 0
      %v392 = vsel %vm387, %v281, 0
      %v395 = vsel %vm387, %v282, 0
      %397 = vmatprep.subr.mxu0 0.0
      %398 = vmatpush1.msra.mxu0 %v370
      %399 = vmatprep.subr.mxu0 0.0
      %400 = vmatpush1.msra.mxu0 %v375
      %401 = vmatprep.subr.mxu0 0.0
      %402 = vmatpush1.msra.mxu0 %v380
      %403 = vmatprep.subr.mxu0 0.0
      %404 = vmatpush1.msra.mxu0 0.0
      %405 = vmatprep.subr.mxu0 0.0
      %406 = vmatpush1.msra.mxu0 0.0
      %407 = vmatprep.subr.mxu0 0.0
      %408 = vmatpush1.msra.mxu0 0.0
      %409 = vmatprep.subr.mxu0 0.0
      %410 = vmatpush1.msra.mxu0 0.0
      %411 = vmatprep.subr.mxu0 0.0
      %412 = vmatpush1.msra.mxu0 0.0
      %413 = vmatprep.subr.mxu0 0.0
      %414 = vmatpush1.msra.mxu0 0.0
      %415 = vmatprep.subr.mxu0 0.0
      %416 = vmatpush1.msra.mxu0 0.0
      %417 = vmatprep.subr.mxu0 0.0
      %418 = vmatpush1.msra.mxu0 0.0
      %419 = vmatprep.subr.mxu0 0.0
      %420 = vmatpush1.msra.mxu0 0.0
      %421 = vmatprep.subr.mxu0 0.0
      %422 = vmatpush1.msra.mxu0 0.0
      %423 = vmatprep.subr.mxu0 0.0
      %424 = vmatpush1.msra.mxu0 0.0
      %425 = vmatprep.subr.mxu0 0.0
      %426 = vmatpush1.msra.mxu0 0.0
      %427 = vmatprep.subr.mxu0 0.0
      %428 = vmatpush1.msra.mxu0 0.0
      %429 = vmatprep.subr.mxu0 0.0
      %430 = vmatpush1.msra.mxu0 0.0
      %431 = vmatprep.subr.mxu0 0.0
      %432 = vmatpush1.msra.mxu0 0.0
      %433 = vmatprep.subr.mxu0 0.0
      %434 = vmatpush1.msra.mxu0 0.0
      %435 = vmatprep.subr.mxu0 0.0
      %436 = vmatpush1.msra.mxu0 0.0
      %437 = vmatprep.subr.mxu0 0.0
      %438 = vmatpush1.msra.mxu0 0.0
      %439 = vmatprep.subr.mxu0 0.0
      %440 = vmatpush1.msra.mxu0 0.0
      %441 = vmatprep.subr.mxu0 0.0
      %442 = vmatpush1.msra.mxu0 0.0
      %443 = vmatprep.subr.mxu0 0.0
      %444 = vmatpush1.msra.mxu0 0.0
      %445 = vmatprep.subr.mxu0 0.0
      %446 = vmatpush1.msra.mxu0 0.0
      %447 = vmatprep.subr.mxu0 0.0
      %448 = vmatpush1.msra.mxu0 0.0
      %449 = vmatprep.subr.mxu0 0.0
      %450 = vmatpush1.msra.mxu0 0.0
      %451 = vmatprep.subr.mxu0 0.0
      %452 = vmatpush1.msra.mxu0 0.0
      %453 = vmatprep.subr.mxu0 0.0
      %454 = vmatpush1.msra.mxu0 0.0
      %455 = vmatprep.subr.mxu0 0.0
      %456 = vmatpush1.msra.mxu0 0.0
      %457 = vmatprep.subr.mxu0 0.0
      %458 = vmatpush1.msra.mxu0 0.0
      %459 = vmatprep.subr.mxu0 0.0
      %460 = vmatpush1.msra.mxu0 0.0
      %461 = vmatprep.mubr.f32.mxu0 0.0
      %462 = vmatmul.mubr.f32.gmra.mrb[0].mxu0 %v389
      %v463 = vpop.f32.mrb[0].mxu0
      %v464 = vadd.f32 %v386, %v463
      %v465 = vpop.f32.mrb[0].mxu0
      %466 = vmatprep.mubr.f32.mxu0 0.0
      %467 = vmatmul.mubr.f32.gmra.mrb[0].mxu0 %v392
      %v468 = vpop.f32.mrb[0].mxu0
      %v469 = vadd.f32 %v386, %v468
      %v470 = vpop.f32.mrb[0].mxu0
      %471 = vmatprep.mubr.f32.mxu0 0.0
      %472 = vmatmul.mubr.f32.gmra.mrb[0].mxu0 %v395
      %v473 = vpop.f32.mrb[0].mxu0
      %v474 = vadd.f32 %v386, %v473
      %v475 = vpop.f32.mrb[0].mxu0
      %476 = vdwg.mxu0
      %v477 = vmax.f32 %v464, 0.0
      %v478 = vmax.f32 %v469, 0.0
      %v479 = vmax.f32 %v474, 0.0
      %v480 = vld [vmem:[%s4 + $0x10] sm:$0xff]
      %v481 = vld [vmem:[%s4 + $0x18] sm:$0xff]
      %v482 = vld [vmem:[%s4 + $0x20] sm:$0xff]
      %v483 = vld [vmem:[%s4 + $0x28] sm:$0xff]
      %vm484 = vcmask 261120
      %v486 = vsel %vm484, %v477, 0
      %v489 = vsel %vm484, %v478, 0
      %v492 = vsel %vm484, %v479, 0
      %494 = vmatprep.subr.mxu0 0.0
      %495 = vmatpush1.msra.mxu0 %v480
      %496 = vmatprep.subr.mxu0 0.0
      %497 = vmatpush1.msra.mxu0 %v481
      %498 = vmatprep.subr.mxu0 0.0
      %499 = vmatpush1.msra.mxu0 %v482
      %500 = vmatprep.subr.mxu0 0.0
      %501 = vmatpush1.msra.mxu0 %v483
      %502 = vmatprep.subr.mxu0 0.0
      %503 = vmatpush1.msra.mxu0 0.0
      %504 = vmatprep.subr.mxu0 0.0
      %505 = vmatpush1.msra.mxu0 0.0
      %506 = vmatprep.subr.mxu0 0.0
      %507 = vmatpush1.msra.mxu0 0.0
      %508 = vmatprep.subr.mxu0 0.0
      %509 = vmatpush1.msra.mxu0 0.0
      %510 = vmatprep.subr.mxu0 0.0
      %511 = vmatpush1.msra.mxu0 0.0
      %512 = vmatprep.subr.mxu0 0.0
      %513 = vmatpush1.msra.mxu0 0.0
      %514 = vmatprep.subr.mxu0 0.0
      %515 = vmatpush1.msra.mxu0 0.0
      %516 = vmatprep.subr.mxu0 0.0
      %517 = vmatpush1.msra.mxu0 0.0
      %518 = vmatprep.subr.mxu0 0.0
      %519 = vmatpush1.msra.mxu0 0.0
      %520 = vmatprep.subr.mxu0 0.0
      %521 = vmatpush1.msra.mxu0 0.0
      %522 = vmatprep.subr.mxu0 0.0
      %523 = vmatpush1.msra.mxu0 0.0
      %524 = vmatprep.subr.mxu0 0.0
      %525 = vmatpush1.msra.mxu0 0.0
      %526 = vmatprep.subr.mxu0 0.0
      %527 = vmatpush1.msra.mxu0 0.0
      %528 = vmatprep.subr.mxu0 0.0
      %529 = vmatpush1.msra.mxu0 0.0
      %530 = vmatprep.subr.mxu0 0.0
      %531 = vmatpush1.msra.mxu0 0.0
      %532 = vmatprep.subr.mxu0 0.0
      %533 = vmatpush1.msra.mxu0 0.0
      %534 = vmatprep.subr.mxu0 0.0
      %535 = vmatpush1.msra.mxu0 0.0
      %536 = vmatprep.subr.mxu0 0.0
      %537 = vmatpush1.msra.mxu0 0.0
      %538 = vmatprep.subr.mxu0 0.0
      %539 = vmatpush1.msra.mxu0 0.0
      %540 = vmatprep.subr.mxu0 0.0
      %541 = vmatpush1.msra.mxu0 0.0
      %542 = vmatprep.subr.mxu0 0.0
      %543 = vmatpush1.msra.mxu0 0.0
      %544 = vmatprep.subr.mxu0 0.0
      %545 = vmatpush1.msra.mxu0 0.0
      %546 = vmatprep.subr.mxu0 0.0
      %547 = vmatpush1.msra.mxu0 0.0
      %548 = vmatprep.subr.mxu0 0.0
      %549 = vmatpush1.msra.mxu0 0.0
      %550 = vmatprep.subr.mxu0 0.0
      %551 = vmatpush1.msra.mxu0 0.0
      %552 = vmatprep.subr.mxu0 0.0
      %553 = vmatpush1.msra.mxu0 0.0
      %554 = vmatprep.subr.mxu0 0.0
      %555 = vmatpush1.msra.mxu0 0.0
      %556 = vmatprep.subr.mxu0 0.0
      %557 = vmatpush1.msra.mxu0 0.0
      %558 = vmatprep.mubr.f32.mxu0 0.0
      %559 = vmatmul.mubr.f32.gmra.mrb[0].mxu0 %v486
      %v560 = vpop.f32.mrb[0].mxu0
      %v561 = vadd.f32 0.0, %v560
      %v562 = vpop.f32.mrb[0].mxu0
      %563 = vmatprep.mubr.f32.mxu0 0.0
      %564 = vmatmul.mubr.f32.gmra.mrb[0].mxu0 %v489
      %v565 = vpop.f32.mrb[0].mxu0
      %v566 = vadd.f32 0.0, %v565
      %v567 = vpop.f32.mrb[0].mxu0
      %568 = vmatprep.mubr.f32.mxu0 0.0
      %569 = vmatmul.mubr.f32.gmra.mrb[0].mxu0 %v492
      %v570 = vpop.f32.mrb[0].mxu0
      %v571 = vadd.f32 0.0, %v570
      %v572 = vpop.f32.mrb[0].mxu0
      %573 = vdwg.mxu0
      %v574 = vlaneseq
      %v575 = vshrl.u32 %v574, 7
      %v576 = vsub.s32 1, %v575
      %v577 = vrot.slane %v290, %v576
      %578 = vmatprep.subr.mxu0 0.0
      %579 = vmatpush1.msra.mxu0 %v561
      %580 = vmatprep.subr.mxu0 0.0
      %581 = vmatpush1.msra.mxu0 %v566
      %582 = vmatprep.subr.mxu0 0.0
      %583 = vmatpush1.msra.mxu0 %v571
      %584 = vmatprep.subr.mxu0 0.0
      %585 = vmatpush1.msra.mxu0 0.0
      %586 = vmatprep.subr.mxu0 0.0
      %587 = vmatpush1.msra.mxu0 0.0
      %588 = vmatprep.subr.mxu0 0.0
      %589 = vmatpush1.msra.mxu0 0.0
      %590 = vmatprep.subr.mxu0 0.0
      %591 = vmatpush1.msra.mxu0 0.0
      %592 = vmatprep.subr.mxu0 0.0
      %593 = vmatpush1.msra.mxu0 0.0
      %594 = vmatprep.subr.mxu0 0.0
      %595 = vmatpush1.msra.mxu0 0.0
      %596 = vmatprep.subr.mxu0 0.0
      %597 = vmatpush1.msra.mxu0 0.0
      %598 = vmatprep.subr.mxu0 0.0
      %599 = vmatpush1.msra.mxu0 0.0
      %600 = vmatprep.subr.mxu0 0.0
      %601 = vmatpush1.msra.mxu0 0.0
      %602 = vmatprep.subr.mxu0 0.0
      %603 = vmatpush1.msra.mxu0 0.0
      %604 = vmatprep.subr.mxu0 0.0
      %605 = vmatpush1.msra.mxu0 0.0
      %606 = vmatprep.subr.mxu0 0.0
      %607 = vmatpush1.msra.mxu0 0.0
      %608 = vmatprep.subr.mxu0 0.0
      %609 = vmatpush1.msra.mxu0 0.0
      %610 = vmatprep.subr.mxu0 0.0
      %611 = vmatpush1.msra.mxu0 0.0
      %612 = vmatprep.subr.mxu0 0.0
      %613 = vmatpush1.msra.mxu0 0.0
      %614 = vmatprep.subr.mxu0 0.0
      %615 = vmatpush1.msra.mxu0 0.0
      %616 = vmatprep.subr.mxu0 0.0
      %617 = vmatpush1.msra.mxu0 0.0
      %618 = vmatprep.subr.mxu0 0.0
      %619 = vmatpush1.msra.mxu0 0.0
      %620 = vmatprep.subr.mxu0 0.0
      %621 = vmatpush1.msra.mxu0 0.0
      %622 = vmatprep.subr.mxu0 0.0
      %623 = vmatpush1.msra.mxu0 0.0
      %624 = vmatprep.subr.mxu0 0.0
      %625 = vmatpush1.msra.mxu0 0.0
      %626 = vmatprep.subr.mxu0 0.0
      %627 = vmatpush1.msra.mxu0 0.0
      %628 = vmatprep.subr.mxu0 0.0
      %629 = vmatpush1.msra.mxu0 0.0
      %630 = vmatprep.subr.mxu0 0.0
      %631 = vmatpush1.msra.mxu0 0.0
      %632 = vmatprep.subr.mxu0 0.0
      %633 = vmatpush1.msra.mxu0 0.0
      %634 = vmatprep.subr.mxu0 0.0
      %635 = vmatpush1.msra.mxu0 0.0
      %636 = vmatprep.subr.mxu0 0.0
      %637 = vmatpush1.msra.mxu0 0.0
      %638 = vmatprep.subr.mxu0 0.0
      %639 = vmatpush1.msra.mxu0 0.0
      %640 = vmatprep.subr.mxu0 0.0
      %641 = vmatpush1.msra.mxu0 0.0
      %642 = vmatprep.mubr.f32.mxu0 0.0
      %643 = vmatmul.mubr.f32.gmra.mrb[0].mxu0 %v389
      %v644 = vpop.f32.mrb[0].mxu0
      %v645 = vadd.f32 %v577, %v644
      %v646 = vpop.f32.mrb[0].mxu0
      %647 = vmatprep.mubr.f32.mxu0 0.0
      %648 = vmatmul.mubr.f32.gmra.mrb[0].mxu0 %v392
      %v649 = vpop.f32.mrb[0].mxu0
      %v650 = vadd.f32 %v577, %v649
      %v651 = vpop.f32.mrb[0].mxu0
      %652 = vmatprep.mubr.f32.mxu0 0.0
      %653 = vmatmul.mubr.f32.gmra.mrb[0].mxu0 %v395
      %v654 = vpop.f32.mrb[0].mxu0
      %v655 = vadd.f32 %v577, %v654
      %v656 = vpop.f32.mrb[0].mxu0
      %657 = vdwg.mxu0
      %v658 = vmax.f32 %v645, 0.0
      %v659 = vmax.f32 %v650, 0.0
      %v660 = vmax.f32 %v655, 0.0
      %v661 = vld [vmem:[%s4 + $0x30] sm:$0xff]
      %v662 = vld [vmem:[%s4 + $0x38] sm:$0xff]
      %v663 = vld [vmem:[%s4 + $0x40] sm:$0xff]
      %v664 = vld [vmem:[%s4 + $0x48] sm:$0xff]
      %v666 = vsel %vm484, %v658, 0
      %v669 = vsel %vm484, %v659, 0
      %v672 = vsel %vm484, %v660, 0
      %674 = vmatprep.subr.mxu0 0.0
      %675 = vmatpush1.msra.mxu0 %v661
      %676 = vmatprep.subr.mxu0 0.0
      %677 = vmatpush1.msra.mxu0 %v662
      %678 = vmatprep.subr.mxu0 0.0
      %679 = vmatpush1.msra.mxu0 %v663
      %680 = vmatprep.subr.mxu0 0.0
      %681 = vmatpush1.msra.mxu0 %v664
      %682 = vmatprep.subr.mxu0 0.0
      %683 = vmatpush1.msra.mxu0 0.0
      %684 = vmatprep.subr.mxu0 0.0
      %685 = vmatpush1.msra.mxu0 0.0
      %686 = vmatprep.subr.mxu0 0.0
      %687 = vmatpush1.msra.mxu0 0.0
      %688 = vmatprep.subr.mxu0 0.0
      %689 = vmatpush1.msra.mxu0 0.0
      %690 = vmatprep.subr.mxu0 0.0
      %691 = vmatpush1.msra.mxu0 0.0
      %692 = vmatprep.subr.mxu0 0.0
      %693 = vmatpush1.msra.mxu0 0.0
      %694 = vmatprep.subr.mxu0 0.0
      %695 = vmatpush1.msra.mxu0 0.0
      %696 = vmatprep.subr.mxu0 0.0
      %697 = vmatpush1.msra.mxu0 0.0
      %698 = vmatprep.subr.mxu0 0.0
      %699 = vmatpush1.msra.mxu0 0.0
      %700 = vmatprep.subr.mxu0 0.0
      %701 = vmatpush1.msra.mxu0 0.0
      %702 = vmatprep.subr.mxu0 0.0
      %703 = vmatpush1.msra.mxu0 0.0
      %704 = vmatprep.subr.mxu0 0.0
      %705 = vmatpush1.msra.mxu0 0.0
      %706 = vmatprep.subr.mxu0 0.0
      %707 = vmatpush1.msra.mxu0 0.0
      %708 = vmatprep.subr.mxu0 0.0
      %709 = vmatpush1.msra.mxu0 0.0
      %710 = vmatprep.subr.mxu0 0.0
      %711 = vmatpush1.msra.mxu0 0.0
      %712 = vmatprep.subr.mxu0 0.0
      %713 = vmatpush1.msra.mxu0 0.0
      %714 = vmatprep.subr.mxu0 0.0
      %715 = vmatpush1.msra.mxu0 0.0
      %716 = vmatprep.subr.mxu0 0.0
      %717 = vmatpush1.msra.mxu0 0.0
      %718 = vmatprep.subr.mxu0 0.0
      %719 = vmatpush1.msra.mxu0 0.0
      %720 = vmatprep.subr.mxu0 0.0
      %721 = vmatpush1.msra.mxu0 0.0
      %722 = vmatprep.subr.mxu0 0.0
      %723 = vmatpush1.msra.mxu0 0.0
      %724 = vmatprep.subr.mxu0 0.0
      %725 = vmatpush1.msra.mxu0 0.0
      %726 = vmatprep.subr.mxu0 0.0
      %727 = vmatpush1.msra.mxu0 0.0
      %728 = vmatprep.subr.mxu0 0.0
      %729 = vmatpush1.msra.mxu0 0.0
      %730 = vmatprep.subr.mxu0 0.0
      %731 = vmatpush1.msra.mxu0 0.0
      %732 = vmatprep.subr.mxu0 0.0
      %733 = vmatpush1.msra.mxu0 0.0
      %734 = vmatprep.subr.mxu0 0.0
      %735 = vmatpush1.msra.mxu0 0.0
      %736 = vmatprep.subr.mxu0 0.0
      %737 = vmatpush1.msra.mxu0 0.0
      %738 = vmatprep.mubr.f32.mxu0 0.0
      %739 = vmatmul.mubr.f32.gmra.mrb[0].mxu0 %v666
      %v740 = vpop.f32.mrb[0].mxu0
      %v741 = vadd.f32 0.0, %v740
      %v742 = vpop.f32.mrb[0].mxu0
      %743 = vmatprep.mubr.f32.mxu0 0.0
      %744 = vmatmul.mubr.f32.gmra.mrb[0].mxu0 %v669
      %v745 = vpop.f32.mrb[0].mxu0
      %v746 = vadd.f32 0.0, %v745
      %v747 = vpop.f32.mrb[0].mxu0
      %748 = vmatprep.mubr.f32.mxu0 0.0
      %749 = vmatmul.mubr.f32.gmra.mrb[0].mxu0 %v672
      %v750 = vpop.f32.mrb[0].mxu0
      %v751 = vadd.f32 0.0, %v750
      %v752 = vpop.f32.mrb[0].mxu0
      %753 = vdwg.mxu0
      %v754 = vlaneseq
      %v755 = vshrl.u32 %v754, 7
      %v756 = vsub.s32 2, %v755
      %v757 = vrot.slane %v290, %v756
      %758 = vmatprep.subr.mxu0 0.0
      %759 = vmatpush1.msra.mxu0 %v741
      %760 = vmatprep.subr.mxu0 0.0
      %761 = vmatpush1.msra.mxu0 %v746
      %762 = vmatprep.subr.mxu0 0.0
      %763 = vmatpush1.msra.mxu0 %v751
      %764 = vmatprep.subr.mxu0 0.0
      %765 = vmatpush1.msra.mxu0 0.0
      %766 = vmatprep.subr.mxu0 0.0
      %767 = vmatpush1.msra.mxu0 0.0
      %768 = vmatprep.subr.mxu0 0.0
      %769 = vmatpush1.msra.mxu0 0.0
      %770 = vmatprep.subr.mxu0 0.0
      %771 = vmatpush1.msra.mxu0 0.0
      %772 = vmatprep.subr.mxu0 0.0
      %773 = vmatpush1.msra.mxu0 0.0
      %774 = vmatprep.subr.mxu0 0.0
      %775 = vmatpush1.msra.mxu0 0.0
      %776 = vmatprep.subr.mxu0 0.0
      %777 = vmatpush1.msra.mxu0 0.0
      %778 = vmatprep.subr.mxu0 0.0
      %779 = vmatpush1.msra.mxu0 0.0
      %780 = vmatprep.subr.mxu0 0.0
      %781 = vmatpush1.msra.mxu0 0.0
      %782 = vmatprep.subr.mxu0 0.0
      %783 = vmatpush1.msra.mxu0 0.0
      %784 = vmatprep.subr.mxu0 0.0
      %785 = vmatpush1.msra.mxu0 0.0
      %786 = vmatprep.subr.mxu0 0.0
      %787 = vmatpush1.msra.mxu0 0.0
      %788 = vmatprep.subr.mxu0 0.0
      %789 = vmatpush1.msra.mxu0 0.0
      %790 = vmatprep.subr.mxu0 0.0
      %791 = vmatpush1.msra.mxu0 0.0
      %792 = vmatprep.subr.mxu0 0.0
      %793 = vmatpush1.msra.mxu0 0.0
      %794 = vmatprep.subr.mxu0 0.0
      %795 = vmatpush1.msra.mxu0 0.0
      %796 = vmatprep.subr.mxu0 0.0
      %797 = vmatpush1.msra.mxu0 0.0
      %798 = vmatprep.subr.mxu0 0.0
      %799 = vmatpush1.msra.mxu0 0.0
      %800 = vmatprep.subr.mxu0 0.0
      %801 = vmatpush1.msra.mxu0 0.0
      %802 = vmatprep.subr.mxu0 0.0
      %803 = vmatpush1.msra.mxu0 0.0
      %804 = vmatprep.subr.mxu0 0.0
      %805 = vmatpush1.msra.mxu0 0.0
      %806 = vmatprep.subr.mxu0 0.0
      %807 = vmatpush1.msra.mxu0 0.0
      %808 = vmatprep.subr.mxu0 0.0
      %809 = vmatpush1.msra.mxu0 0.0
      %810 = vmatprep.subr.mxu0 0.0
      %811 = vmatpush1.msra.mxu0 0.0
      %812 = vmatprep.subr.mxu0 0.0
      %813 = vmatpush1.msra.mxu0 0.0
      %814 = vmatprep.subr.mxu0 0.0
      %815 = vmatpush1.msra.mxu0 0.0
      %816 = vmatprep.subr.mxu0 0.0
      %817 = vmatpush1.msra.mxu0 0.0
      %818 = vmatprep.subr.mxu0 0.0
      %819 = vmatpush1.msra.mxu0 0.0
      %820 = vmatprep.subr.mxu0 0.0
      %821 = vmatpush1.msra.mxu0 0.0
      %822 = vmatprep.mubr.f32.mxu0 0.0
      %823 = vmatmul.mubr.f32.gmra.mrb[0].mxu0 %v389
      %v824 = vpop.f32.mrb[0].mxu0
      %v825 = vadd.f32 %v757, %v824
      %v826 = vpop.f32.mrb[0].mxu0
      %827 = vmatprep.mubr.f32.mxu0 0.0
      %828 = vmatmul.mubr.f32.gmra.mrb[0].mxu0 %v392
      %v829 = vpop.f32.mrb[0].mxu0
      %v830 = vadd.f32 %v757, %v829
      %v831 = vpop.f32.mrb[0].mxu0
      %832 = vmatprep.mubr.f32.mxu0 0.0
      %833 = vmatmul.mubr.f32.gmra.mrb[0].mxu0 %v395
      %v834 = vpop.f32.mrb[0].mxu0
      %v835 = vadd.f32 %v757, %v834
      %v836 = vpop.f32.mrb[0].mxu0
      %837 = vdwg.mxu0
      %v838 = vmax.f32 %v825, 0.0
      %v839 = vmax.f32 %v830, 0.0
      %v840 = vmax.f32 %v835, 0.0
      %841 = vrot.lane.b32.xlu0 %v658, 32
      %v842 = vpop.permute.xlu0 %841
      %843 = vrot.lane.b32.xlu0 %v659, 32
      %v844 = vpop.permute.xlu0 %843
      %845 = vrot.lane.b32.xlu0 %v660, 32
      %v846 = vpop.permute.xlu0 %845
      %853 = vrot.lane.b32.xlu0 %v838, 64
      %v854 = vpop.permute.xlu0 %853
      %855 = vrot.lane.b32.xlu0 %v839, 64
      %v856 = vpop.permute.xlu0 %855
      %857 = vrot.lane.b32.xlu0 %v840, 64
      %v858 = vpop.permute.xlu0 %857
      %v862 = vsel %vm484, %v477, %v842
      %v863 = vsel %vm484, %v478, %v844
      %v864 = vsel %vm484, %v479, %v846
      %vm865 = vcmask 523264
      %v866 = vsel %vm865, %v862, %v854
      %v867 = vsel %vm865, %v863, %v856
      %v868 = vsel %vm865, %v864, %v858
      %v869 = vld [vmem:[%s4 + $0x50] sm:$0xff]
      %v870 = vld [vmem:[%s4 + $0x58] sm:$0xff]
      %v871 = vld [vmem:[%s4 + $0x60] sm:$0xff]
      %v872 = vld [vmem:[%s4 + $0x68] sm:$0xff]
      %v873 = vld [vmem:[%s4 + $0x70] sm:$0xff]
      %v874 = vld [vmem:[%s4 + $0x78] sm:$0xff]
      %v875 = vld [vmem:[%s4 + $0x80] sm:$0xff]
      %v876 = vld [vmem:[%s4 + $0x88] sm:$0xff]
      %v877 = vld [vmem:[%s4 + $0x90] sm:$0xff]
      %v878 = vld [vmem:[%s4 + $0x98] sm:$0xff]
      %v879 = vld [vmem:[%s4 + $0xa0] sm:$0xff]
      %v880 = vld [vmem:[%s4 + $0xa8] sm:$0xff]
      %v881 = vlaneseq
      %v882 = vshrl.u32 %v881, 7
      %v883 = vsub.s32 3, %v882
      %v884 = vrot.slane %v290, %v883
      %vm885 = vcmask 785408
      %v887 = vsel %vm885, %v866, 0
      %v890 = vsel %vm885, %v867, 0
      %v893 = vsel %vm885, %v868, 0
      %895 = vmatprep.subr.mxu0 0.0
      %896 = vmatpush1.msra.mxu0 %v869
      %897 = vmatprep.subr.mxu0 0.0
      %898 = vmatpush1.msra.mxu0 %v870
      %899 = vmatprep.subr.mxu0 0.0
      %900 = vmatpush1.msra.mxu0 %v871
      %901 = vmatprep.subr.mxu0 0.0
      %902 = vmatpush1.msra.mxu0 %v872
      %903 = vmatprep.subr.mxu0 0.0
      %904 = vmatpush1.msra.mxu0 %v873
      %905 = vmatprep.subr.mxu0 0.0
      %906 = vmatpush1.msra.mxu0 %v874
      %907 = vmatprep.subr.mxu0 0.0
      %908 = vmatpush1.msra.mxu0 %v875
      %909 = vmatprep.subr.mxu0 0.0
      %910 = vmatpush1.msra.mxu0 %v876
      %911 = vmatprep.subr.mxu0 0.0
      %912 = vmatpush1.msra.mxu0 %v877
      %913 = vmatprep.subr.mxu0 0.0
      %914 = vmatpush1.msra.mxu0 %v878
      %915 = vmatprep.subr.mxu0 0.0
      %916 = vmatpush1.msra.mxu0 %v879
      %917 = vmatprep.subr.mxu0 0.0
      %918 = vmatpush1.msra.mxu0 %v880
      %919 = vmatprep.subr.mxu0 0.0
      %920 = vmatpush1.msra.mxu0 0.0
      %921 = vmatprep.subr.mxu0 0.0
      %922 = vmatpush1.msra.mxu0 0.0
      %923 = vmatprep.subr.mxu0 0.0
      %924 = vmatpush1.msra.mxu0 0.0
      %925 = vmatprep.subr.mxu0 0.0
      %926 = vmatpush1.msra.mxu0 0.0
      %927 = vmatprep.subr.mxu0 0.0
      %928 = vmatpush1.msra.mxu0 0.0
      %929 = vmatprep.subr.mxu0 0.0
      %930 = vmatpush1.msra.mxu0 0.0
      %931 = vmatprep.subr.mxu0 0.0
      %932 = vmatpush1.msra.mxu0 0.0
      %933 = vmatprep.subr.mxu0 0.0
      %934 = vmatpush1.msra.mxu0 0.0
      %935 = vmatprep.subr.mxu0 0.0
      %936 = vmatpush1.msra.mxu0 0.0
      %937 = vmatprep.subr.mxu0 0.0
      %938 = vmatpush1.msra.mxu0 0.0
      %939 = vmatprep.subr.mxu0 0.0
      %940 = vmatpush1.msra.mxu0 0.0
      %941 = vmatprep.subr.mxu0 0.0
      %942 = vmatpush1.msra.mxu0 0.0
      %943 = vmatprep.subr.mxu0 0.0
      %944 = vmatpush1.msra.mxu0 0.0
      %945 = vmatprep.subr.mxu0 0.0
      %946 = vmatpush1.msra.mxu0 0.0
      %947 = vmatprep.subr.mxu0 0.0
      %948 = vmatpush1.msra.mxu0 0.0
      %949 = vmatprep.subr.mxu0 0.0
      %950 = vmatpush1.msra.mxu0 0.0
      %951 = vmatprep.subr.mxu0 0.0
      %952 = vmatpush1.msra.mxu0 0.0
      %953 = vmatprep.subr.mxu0 0.0
      %954 = vmatpush1.msra.mxu0 0.0
      %955 = vmatprep.subr.mxu0 0.0
      %956 = vmatpush1.msra.mxu0 0.0
      %957 = vmatprep.subr.mxu0 0.0
      %958 = vmatpush1.msra.mxu0 0.0
      %959 = vmatprep.mubr.f32.mxu0 0.0
      %960 = vmatmul.mubr.f32.gmra.mrb[0].mxu0 %v887
      %v961 = vpop.f32.mrb[0].mxu0
      %v962 = vadd.f32 %v884, %v961
      %v963 = vpop.f32.mrb[0].mxu0
      %964 = vmatprep.mubr.f32.mxu0 0.0
      %965 = vmatmul.mubr.f32.gmra.mrb[0].mxu0 %v890
      %v966 = vpop.f32.mrb[0].mxu0
      %v967 = vadd.f32 %v884, %v966
      %v968 = vpop.f32.mrb[0].mxu0
      %969 = vmatprep.mubr.f32.mxu0 0.0
      %970 = vmatmul.mubr.f32.gmra.mrb[0].mxu0 %v893
      %v971 = vpop.f32.mrb[0].mxu0
      %v972 = vadd.f32 %v884, %v971
      %v973 = vpop.f32.mrb[0].mxu0
      %974 = vdwg.mxu0
      %v975 = vmax.f32 %v962, 0.0
      %v976 = vmax.f32 %v967, 0.0
      %v977 = vmax.f32 %v972, 0.0
      %v978 = vld [vmem:[%s4 + $0xb0] sm:$0xff]
      %v979 = vld [vmem:[%s4 + $0xb8] sm:$0xff]
      %v980 = vld [vmem:[%s4 + $0xc0] sm:$0xff]
      %v981 = vld [vmem:[%s4 + $0xc8] sm:$0xff]
      %v982 = vlaneseq
      %v983 = vshrl.u32 %v982, 7
      %v984 = vsub.s32 4, %v983
      %v985 = vrot.slane %v290, %v984
      %v987 = vsel %vm484, %v975, 0
      %v990 = vsel %vm484, %v976, 0
      %v993 = vsel %vm484, %v977, 0
      %995 = vmatprep.subr.mxu0 0.0
      %996 = vmatpush1.msra.mxu0 %v978
      %997 = vmatprep.subr.mxu0 0.0
      %998 = vmatpush1.msra.mxu0 %v979
      %999 = vmatprep.subr.mxu0 0.0
      %1000 = vmatpush1.msra.mxu0 %v980
      %1001 = vmatprep.subr.mxu0 0.0
      %1002 = vmatpush1.msra.mxu0 %v981
      %1003 = vmatprep.subr.mxu0 0.0
      %1004 = vmatpush1.msra.mxu0 0.0
      %1005 = vmatprep.subr.mxu0 0.0
      %1006 = vmatpush1.msra.mxu0 0.0
      %1007 = vmatprep.subr.mxu0 0.0
      %1008 = vmatpush1.msra.mxu0 0.0
      %1009 = vmatprep.subr.mxu0 0.0
      %1010 = vmatpush1.msra.mxu0 0.0
      %1011 = vmatprep.subr.mxu0 0.0
      %1012 = vmatpush1.msra.mxu0 0.0
      %1013 = vmatprep.subr.mxu0 0.0
      %1014 = vmatpush1.msra.mxu0 0.0
      %1015 = vmatprep.subr.mxu0 0.0
      %1016 = vmatpush1.msra.mxu0 0.0
      %1017 = vmatprep.subr.mxu0 0.0
      %1018 = vmatpush1.msra.mxu0 0.0
      %1019 = vmatprep.subr.mxu0 0.0
      %1020 = vmatpush1.msra.mxu0 0.0
      %1021 = vmatprep.subr.mxu0 0.0
      %1022 = vmatpush1.msra.mxu0 0.0
      %1023 = vmatprep.subr.mxu0 0.0
      %1024 = vmatpush1.msra.mxu0 0.0
      %1025 = vmatprep.subr.mxu0 0.0
      %1026 = vmatpush1.msra.mxu0 0.0
      %1027 = vmatprep.subr.mxu0 0.0
      %1028 = vmatpush1.msra.mxu0 0.0
      %1029 = vmatprep.subr.mxu0 0.0
      %1030 = vmatpush1.msra.mxu0 0.0
      %1031 = vmatprep.subr.mxu0 0.0
      %1032 = vmatpush1.msra.mxu0 0.0
      %1033 = vmatprep.subr.mxu0 0.0
      %1034 = vmatpush1.msra.mxu0 0.0
      %1035 = vmatprep.subr.mxu0 0.0
      %1036 = vmatpush1.msra.mxu0 0.0
      %1037 = vmatprep.subr.mxu0 0.0
      %1038 = vmatpush1.msra.mxu0 0.0
      %1039 = vmatprep.subr.mxu0 0.0
      %1040 = vmatpush1.msra.mxu0 0.0
      %1041 = vmatprep.subr.mxu0 0.0
      %1042 = vmatpush1.msra.mxu0 0.0
      %1043 = vmatprep.subr.mxu0 0.0
      %1044 = vmatpush1.msra.mxu0 0.0
      %1045 = vmatprep.subr.mxu0 0.0
      %1046 = vmatpush1.msra.mxu0 0.0
      %1047 = vmatprep.subr.mxu0 0.0
      %1048 = vmatpush1.msra.mxu0 0.0
      %1049 = vmatprep.subr.mxu0 0.0
      %1050 = vmatpush1.msra.mxu0 0.0
      %1051 = vmatprep.subr.mxu0 0.0
      %1052 = vmatpush1.msra.mxu0 0.0
      %1053 = vmatprep.subr.mxu0 0.0
      %1054 = vmatpush1.msra.mxu0 0.0
      %1055 = vmatprep.subr.mxu0 0.0
      %1056 = vmatpush1.msra.mxu0 0.0
      %1057 = vmatprep.subr.mxu0 0.0
      %1058 = vmatpush1.msra.mxu0 0.0
      %1059 = vmatprep.mubr.f32.mxu0 0.0
      %1060 = vmatmul.mubr.f32.gmra.mrb[0].mxu0 %v987
      %v1061 = vpop.f32.mrb[0].mxu0
      %v1062 = vadd.f32 %v985, %v1061
      %v1063 = vpop.f32.mrb[0].mxu0
      %1064 = vmatprep.mubr.f32.mxu0 0.0
      %1065 = vmatmul.mubr.f32.gmra.mrb[0].mxu0 %v990
      %v1066 = vpop.f32.mrb[0].mxu0
      %v1067 = vadd.f32 %v985, %v1066
      %v1068 = vpop.f32.mrb[0].mxu0
      %1069 = vmatprep.mubr.f32.mxu0 0.0
      %1070 = vmatmul.mubr.f32.gmra.mrb[0].mxu0 %v993
      %v1071 = vpop.f32.mrb[0].mxu0
      %v1072 = vadd.f32 %v985, %v1071
      %v1073 = vpop.f32.mrb[0].mxu0
      %1074 = vdwg.mxu0
      %vm1075 = vcmp.gt.f32.partialorder %v287, 0.0
      %vm1076 = vcmp.gt.f32.partialorder %v288, 0.0
      %vm1077 = vcmp.gt.f32.partialorder %v289, 0.0
      %1079 = vset.pattern.permute.xlu0 0
      %1080 = vperm.xlu0 %1079, %v1062
      %v1081 = vpop.permute.xlu0 %1080
      %1084 = vset.pattern.permute.xlu0 0
      %1085 = vperm.xlu0 %1084, %v1067
      %v1086 = vpop.permute.xlu0 %1085
      %1089 = vset.pattern.permute.xlu0 0
      %1090 = vperm.xlu0 %1089, %v1072
      %v1091 = vpop.permute.xlu0 %1090
      %v1093 = vsel %vm1075, %v1081, -1e+30
      %v1094 = vsel %vm1076, %v1086, -1e+30
      %v1095 = vsel %vm1077, %v1091, -1e+30
      %vm1096 = vcmask 15360
      %v1097 = vsel %vm1096, %v1093, -inf
      %v1098 = vsel %vm1096, %v1094, -inf
      %v1099 = vsel %vm1096, %v1095, -inf
      %v1100 = vmax.f32 %v1097, %v1098
      %v1101 = vmax.f32 %v1100, %v1099
      %v1102 = vrot.slane %v1101, 4
      %v1103 = vmax.f32 %v1101, %v1102
      %v1104 = vrot.slane %v1103, 2
      %v1105 = vmax.f32 %v1103, %v1104
      %v1106 = vrot.slane %v1105, 1
      %v1107 = vmax.f32 %v1105, %v1106
      %v1108 = vmul.f32 %v287, %v1107
      %v1109 = vmul.f32 %v288, %v1107
      %v1110 = vmul.f32 %v289, %v1107
      %v1111 = vsel %vm1096, %v1108, 0.0
      %1112 = vadd.xlane.f32.xlu0 %v1111
      %v1113 = vpop.xlane.xlu0 %1112
      %v1114 = vsel %vm1096, %v1109, 0.0
      %1115 = vadd.xlane.f32.xlu0 %v1114
      %v1116 = vpop.xlane.xlu0 %1115
      %v1117 = vsel %vm1096, %v1110, 0.0
      %1118 = vadd.xlane.f32.xlu0 %v1117
      %v1119 = vpop.xlane.xlu0 %1118
      %v1120 = vsub.f32 %v1062, %v1113
      %v1121 = vsub.f32 %v1067, %v1116
      %v1122 = vsub.f32 %v1072, %v1119
      %v1123 = vmul.f32 %v1120, 1.442695
      %v1124 = vpow.pop %v1123
      %v1125 = vmul.f32 %v1121, 1.442695
      %v1126 = vpow.pop %v1125
      %v1127 = vmul.f32 %v1122, 1.442695
      %v1128 = vpow.pop %v1127
      %1130 = vset.pattern.permute.xlu0 0
      %1131 = vperm.xlu0 %1130, %v1124
      %v1132 = vpop.permute.xlu0 %1131
      %1135 = vset.pattern.permute.xlu0 0
      %1136 = vperm.xlu0 %1135, %v1126
      %v1137 = vpop.permute.xlu0 %1136
      %1140 = vset.pattern.permute.xlu0 0
      %1141 = vperm.xlu0 %1140, %v1128
      %v1142 = vpop.permute.xlu0 %1141
      %v1144 = vmul.f32 %v1132, %v975
      %v1145 = vmul.f32 %v1137, %v976
      %v1146 = vmul.f32 %v1142, %v977
      %v1148 = vsel %vm387, %v286, 0
      %1150 = vmatprep.subr.mxu0 0.0
      %1151 = vmatpush1.msra.mxu0 %v1144
      %1152 = vmatprep.subr.mxu0 0.0
      %1153 = vmatpush1.msra.mxu0 %v1145
      %1154 = vmatprep.subr.mxu0 0.0
      %1155 = vmatpush1.msra.mxu0 %v1146
      %1156 = vmatprep.subr.mxu0 0.0
      %1157 = vmatpush1.msra.mxu0 0.0
      %1158 = vmatprep.subr.mxu0 0.0
      %1159 = vmatpush1.msra.mxu0 0.0
      %1160 = vmatprep.subr.mxu0 0.0
      %1161 = vmatpush1.msra.mxu0 0.0
      %1162 = vmatprep.subr.mxu0 0.0
      %1163 = vmatpush1.msra.mxu0 0.0
      %1164 = vmatprep.subr.mxu0 0.0
      %1165 = vmatpush1.msra.mxu0 0.0
      %1166 = vmatprep.subr.mxu0 0.0
      %1167 = vmatpush1.msra.mxu0 0.0
      %1168 = vmatprep.subr.mxu0 0.0
      %1169 = vmatpush1.msra.mxu0 0.0
      %1170 = vmatprep.subr.mxu0 0.0
      %1171 = vmatpush1.msra.mxu0 0.0
      %1172 = vmatprep.subr.mxu0 0.0
      %1173 = vmatpush1.msra.mxu0 0.0
      %1174 = vmatprep.subr.mxu0 0.0
      %1175 = vmatpush1.msra.mxu0 0.0
      %1176 = vmatprep.subr.mxu0 0.0
      %1177 = vmatpush1.msra.mxu0 0.0
      %1178 = vmatprep.subr.mxu0 0.0
      %1179 = vmatpush1.msra.mxu0 0.0
      %1180 = vmatprep.subr.mxu0 0.0
      %1181 = vmatpush1.msra.mxu0 0.0
      %1182 = vmatprep.subr.mxu0 0.0
      %1183 = vmatpush1.msra.mxu0 0.0
      %1184 = vmatprep.subr.mxu0 0.0
      %1185 = vmatpush1.msra.mxu0 0.0
      %1186 = vmatprep.subr.mxu0 0.0
      %1187 = vmatpush1.msra.mxu0 0.0
      %1188 = vmatprep.subr.mxu0 0.0
      %1189 = vmatpush1.msra.mxu0 0.0
      %1190 = vmatprep.subr.mxu0 0.0
      %1191 = vmatpush1.msra.mxu0 0.0
      %1192 = vmatprep.subr.mxu0 0.0
      %1193 = vmatpush1.msra.mxu0 0.0
      %1194 = vmatprep.subr.mxu0 0.0
      %1195 = vmatpush1.msra.mxu0 0.0
      %1196 = vmatprep.subr.mxu0 0.0
      %1197 = vmatpush1.msra.mxu0 0.0
      %1198 = vmatprep.subr.mxu0 0.0
      %1199 = vmatpush1.msra.mxu0 0.0
      %1200 = vmatprep.subr.mxu0 0.0
      %1201 = vmatpush1.msra.mxu0 0.0
      %1202 = vmatprep.subr.mxu0 0.0
      %1203 = vmatpush1.msra.mxu0 0.0
      %1204 = vmatprep.subr.mxu0 0.0
      %1205 = vmatpush1.msra.mxu0 0.0
      %1206 = vmatprep.subr.mxu0 0.0
      %1207 = vmatpush1.msra.mxu0 0.0
      %1208 = vmatprep.subr.mxu0 0.0
      %1209 = vmatpush1.msra.mxu0 0.0
      %1210 = vmatprep.subr.mxu0 0.0
      %1211 = vmatpush1.msra.mxu0 0.0
      %1212 = vmatprep.subr.mxu0 0.0
      %1213 = vmatpush1.msra.mxu0 0.0
      %1214 = vmatprep.mubr.f32.mxu0 0.0
      %1215 = vmatmul.mubr.f32.gmra.mrb[0].mxu0 %v1148
      %v1216 = vpop.f32.mrb[0].mxu0
      %v1217 = vadd.f32 0.0, %v1216
      %v1218 = vpop.f32.mrb[0].mxu0
      %1219 = vdwg.mxu0
      %1220 = vmatprep.subr.mxu0 0.0
      %1221 = vmatpush1.msra.mxu0 %v1124
      %1222 = vmatprep.subr.mxu0 0.0
      %1223 = vmatpush1.msra.mxu0 %v1126
      %1224 = vmatprep.subr.mxu0 0.0
      %1225 = vmatpush1.msra.mxu0 %v1128
      %1226 = vmatprep.subr.mxu0 0.0
      %1227 = vmatpush1.msra.mxu0 0.0
      %1228 = vmatprep.subr.mxu0 0.0
      %1229 = vmatpush1.msra.mxu0 0.0
      %1230 = vmatprep.subr.mxu0 0.0
      %1231 = vmatpush1.msra.mxu0 0.0
      %1232 = vmatprep.subr.mxu0 0.0
      %1233 = vmatpush1.msra.mxu0 0.0
      %1234 = vmatprep.subr.mxu0 0.0
      %1235 = vmatpush1.msra.mxu0 0.0
      %1236 = vmatprep.subr.mxu0 0.0
      %1237 = vmatpush1.msra.mxu0 0.0
      %1238 = vmatprep.subr.mxu0 0.0
      %1239 = vmatpush1.msra.mxu0 0.0
      %1240 = vmatprep.subr.mxu0 0.0
      %1241 = vmatpush1.msra.mxu0 0.0
      %1242 = vmatprep.subr.mxu0 0.0
      %1243 = vmatpush1.msra.mxu0 0.0
      %1244 = vmatprep.subr.mxu0 0.0
      %1245 = vmatpush1.msra.mxu0 0.0
      %1246 = vmatprep.subr.mxu0 0.0
      %1247 = vmatpush1.msra.mxu0 0.0
      %1248 = vmatprep.subr.mxu0 0.0
      %1249 = vmatpush1.msra.mxu0 0.0
      %1250 = vmatprep.subr.mxu0 0.0
      %1251 = vmatpush1.msra.mxu0 0.0
      %1252 = vmatprep.subr.mxu0 0.0
      %1253 = vmatpush1.msra.mxu0 0.0
      %1254 = vmatprep.subr.mxu0 0.0
      %1255 = vmatpush1.msra.mxu0 0.0
      %1256 = vmatprep.subr.mxu0 0.0
      %1257 = vmatpush1.msra.mxu0 0.0
      %1258 = vmatprep.subr.mxu0 0.0
      %1259 = vmatpush1.msra.mxu0 0.0
      %1260 = vmatprep.subr.mxu0 0.0
      %1261 = vmatpush1.msra.mxu0 0.0
      %1262 = vmatprep.subr.mxu0 0.0
      %1263 = vmatpush1.msra.mxu0 0.0
      %1264 = vmatprep.subr.mxu0 0.0
      %1265 = vmatpush1.msra.mxu0 0.0
      %1266 = vmatprep.subr.mxu0 0.0
      %1267 = vmatpush1.msra.mxu0 0.0
      %1268 = vmatprep.subr.mxu0 0.0
      %1269 = vmatpush1.msra.mxu0 0.0
      %1270 = vmatprep.subr.mxu0 0.0
      %1271 = vmatpush1.msra.mxu0 0.0
      %1272 = vmatprep.subr.mxu0 0.0
      %1273 = vmatpush1.msra.mxu0 0.0
      %1274 = vmatprep.subr.mxu0 0.0
      %1275 = vmatpush1.msra.mxu0 0.0
      %1276 = vmatprep.subr.mxu0 0.0
      %1277 = vmatpush1.msra.mxu0 0.0
      %1278 = vmatprep.subr.mxu0 0.0
      %1279 = vmatpush1.msra.mxu0 0.0
      %1280 = vmatprep.subr.mxu0 0.0
      %1281 = vmatpush1.msra.mxu0 0.0
      %1282 = vmatprep.subr.mxu0 0.0
      %1283 = vmatpush1.msra.mxu0 0.0
      %1284 = vmatprep.mubr.f32.mxu0 0.0
      %1285 = vmatmul.mubr.f32.gmra.mrb[0].mxu0 %v1148
      %v1286 = vpop.f32.mrb[0].mxu0
      %v1287 = vadd.f32 0.0, %v1286
      %v1288 = vpop.f32.mrb[0].mxu0
      %1289 = vdwg.mxu0
      %v1290 = vmax.f32 %v1287, 1e-12
      %1292 = vset.pattern.permute.xlu0 0
      %1293 = vperm.xlu0 %1292, %v1290
      %v1294 = vpop.permute.xlu0 %1293
      %v1296 = vrcp.pop %v1294
      %v1297 = vmul.f32 %v1217, %v1296
      %v1298 = vld [vmem:[%s4 + $0xd0] sm:$0xff]
      %v1299 = vld [vmem:[%s4 + $0xd8] sm:$0xff]
      %v1300 = vld [vmem:[%s4 + $0xe0] sm:$0xff]
      %v1301 = vld [vmem:[%s4 + $0xe8] sm:$0xff]
      %v1302 = vlaneseq
      %v1303 = vshrl.u32 %v1302, 7
      %v1304 = vsub.s32 5, %v1303
      %v1305 = vrot.slane %v290, %v1304
      %v1307 = vsel %vm484, %v1297, 0
      %1309 = vmatprep.subr.mxu0 0.0
      %1310 = vmatpush1.msra.mxu0 %v1298
      %1311 = vmatprep.subr.mxu0 0.0
      %1312 = vmatpush1.msra.mxu0 %v1299
      %1313 = vmatprep.subr.mxu0 0.0
      %1314 = vmatpush1.msra.mxu0 %v1300
      %1315 = vmatprep.subr.mxu0 0.0
      %1316 = vmatpush1.msra.mxu0 %v1301
      %1317 = vmatprep.subr.mxu0 0.0
      %1318 = vmatpush1.msra.mxu0 0.0
      %1319 = vmatprep.subr.mxu0 0.0
      %1320 = vmatpush1.msra.mxu0 0.0
      %1321 = vmatprep.subr.mxu0 0.0
      %1322 = vmatpush1.msra.mxu0 0.0
      %1323 = vmatprep.subr.mxu0 0.0
      %1324 = vmatpush1.msra.mxu0 0.0
      %1325 = vmatprep.subr.mxu0 0.0
      %1326 = vmatpush1.msra.mxu0 0.0
      %1327 = vmatprep.subr.mxu0 0.0
      %1328 = vmatpush1.msra.mxu0 0.0
      %1329 = vmatprep.subr.mxu0 0.0
      %1330 = vmatpush1.msra.mxu0 0.0
      %1331 = vmatprep.subr.mxu0 0.0
      %1332 = vmatpush1.msra.mxu0 0.0
      %1333 = vmatprep.subr.mxu0 0.0
      %1334 = vmatpush1.msra.mxu0 0.0
      %1335 = vmatprep.subr.mxu0 0.0
      %1336 = vmatpush1.msra.mxu0 0.0
      %1337 = vmatprep.subr.mxu0 0.0
      %1338 = vmatpush1.msra.mxu0 0.0
      %1339 = vmatprep.subr.mxu0 0.0
      %1340 = vmatpush1.msra.mxu0 0.0
      %1341 = vmatprep.subr.mxu0 0.0
      %1342 = vmatpush1.msra.mxu0 0.0
      %1343 = vmatprep.subr.mxu0 0.0
      %1344 = vmatpush1.msra.mxu0 0.0
      %1345 = vmatprep.subr.mxu0 0.0
      %1346 = vmatpush1.msra.mxu0 0.0
      %1347 = vmatprep.subr.mxu0 0.0
      %1348 = vmatpush1.msra.mxu0 0.0
      %1349 = vmatprep.subr.mxu0 0.0
      %1350 = vmatpush1.msra.mxu0 0.0
      %1351 = vmatprep.subr.mxu0 0.0
      %1352 = vmatpush1.msra.mxu0 0.0
      %1353 = vmatprep.subr.mxu0 0.0
      %1354 = vmatpush1.msra.mxu0 0.0
      %1355 = vmatprep.subr.mxu0 0.0
      %1356 = vmatpush1.msra.mxu0 0.0
      %1357 = vmatprep.subr.mxu0 0.0
      %1358 = vmatpush1.msra.mxu0 0.0
      %1359 = vmatprep.subr.mxu0 0.0
      %1360 = vmatpush1.msra.mxu0 0.0
      %1361 = vmatprep.subr.mxu0 0.0
      %1362 = vmatpush1.msra.mxu0 0.0
      %1363 = vmatprep.subr.mxu0 0.0
      %1364 = vmatpush1.msra.mxu0 0.0
      %1365 = vmatprep.subr.mxu0 0.0
      %1366 = vmatpush1.msra.mxu0 0.0
      %1367 = vmatprep.subr.mxu0 0.0
      %1368 = vmatpush1.msra.mxu0 0.0
      %1369 = vmatprep.subr.mxu0 0.0
      %1370 = vmatpush1.msra.mxu0 0.0
      %1371 = vmatprep.subr.mxu0 0.0
      %1372 = vmatpush1.msra.mxu0 0.0
      %1373 = vmatprep.mubr.f32.mxu0 0.0
      %1374 = vmatmul.mubr.f32.gmra.mrb[0].mxu0 %v1307
      %v1375 = vpop.f32.mrb[0].mxu0
      %v1376 = vadd.f32 %v1305, %v1375
      %v1377 = vpop.f32.mrb[0].mxu0
      %1378 = vdwg.mxu0
      %v1379 = vmax.f32 %v1376, 0.0
      %v1380 = vld [vmem:[%s4 + $0xf0] sm:$0xff]
      %v1381 = vld [vmem:[%s4 + $0xf8] sm:$0xff]
      %v1382 = vld [vmem:[%s4 + $0x100] sm:$0xff]
      %v1383 = vld [vmem:[%s4 + $0x108] sm:$0xff]
      %v1384 = vlaneseq
      %v1385 = vshrl.u32 %v1384, 7
      %v1386 = vsub.s32 6, %v1385
      %v1387 = vrot.slane %v290, %v1386
      %v1389 = vsel %vm484, %v1379, 0
      %1391 = vmatprep.subr.mxu0 0.0
      %1392 = vmatpush1.msra.mxu0 %v1380
      %1393 = vmatprep.subr.mxu0 0.0
      %1394 = vmatpush1.msra.mxu0 %v1381
      %1395 = vmatprep.subr.mxu0 0.0
      %1396 = vmatpush1.msra.mxu0 %v1382
      %1397 = vmatprep.subr.mxu0 0.0
      %1398 = vmatpush1.msra.mxu0 %v1383
      %1399 = vmatprep.subr.mxu0 0.0
      %1400 = vmatpush1.msra.mxu0 0.0
      %1401 = vmatprep.subr.mxu0 0.0
      %1402 = vmatpush1.msra.mxu0 0.0
      %1403 = vmatprep.subr.mxu0 0.0
      %1404 = vmatpush1.msra.mxu0 0.0
      %1405 = vmatprep.subr.mxu0 0.0
      %1406 = vmatpush1.msra.mxu0 0.0
      %1407 = vmatprep.subr.mxu0 0.0
      %1408 = vmatpush1.msra.mxu0 0.0
      %1409 = vmatprep.subr.mxu0 0.0
      %1410 = vmatpush1.msra.mxu0 0.0
      %1411 = vmatprep.subr.mxu0 0.0
      %1412 = vmatpush1.msra.mxu0 0.0
      %1413 = vmatprep.subr.mxu0 0.0
      %1414 = vmatpush1.msra.mxu0 0.0
      %1415 = vmatprep.subr.mxu0 0.0
      %1416 = vmatpush1.msra.mxu0 0.0
      %1417 = vmatprep.subr.mxu0 0.0
      %1418 = vmatpush1.msra.mxu0 0.0
      %1419 = vmatprep.subr.mxu0 0.0
      %1420 = vmatpush1.msra.mxu0 0.0
      %1421 = vmatprep.subr.mxu0 0.0
      %1422 = vmatpush1.msra.mxu0 0.0
      %1423 = vmatprep.subr.mxu0 0.0
      %1424 = vmatpush1.msra.mxu0 0.0
      %1425 = vmatprep.subr.mxu0 0.0
      %1426 = vmatpush1.msra.mxu0 0.0
      %1427 = vmatprep.subr.mxu0 0.0
      %1428 = vmatpush1.msra.mxu0 0.0
      %1429 = vmatprep.subr.mxu0 0.0
      %1430 = vmatpush1.msra.mxu0 0.0
      %1431 = vmatprep.subr.mxu0 0.0
      %1432 = vmatpush1.msra.mxu0 0.0
      %1433 = vmatprep.subr.mxu0 0.0
      %1434 = vmatpush1.msra.mxu0 0.0
      %1435 = vmatprep.subr.mxu0 0.0
      %1436 = vmatpush1.msra.mxu0 0.0
      %1437 = vmatprep.subr.mxu0 0.0
      %1438 = vmatpush1.msra.mxu0 0.0
      %1439 = vmatprep.subr.mxu0 0.0
      %1440 = vmatpush1.msra.mxu0 0.0
      %1441 = vmatprep.subr.mxu0 0.0
      %1442 = vmatpush1.msra.mxu0 0.0
      %1443 = vmatprep.subr.mxu0 0.0
      %1444 = vmatpush1.msra.mxu0 0.0
      %1445 = vmatprep.subr.mxu0 0.0
      %1446 = vmatpush1.msra.mxu0 0.0
      %1447 = vmatprep.subr.mxu0 0.0
      %1448 = vmatpush1.msra.mxu0 0.0
      %1449 = vmatprep.subr.mxu0 0.0
      %1450 = vmatpush1.msra.mxu0 0.0
      %1451 = vmatprep.subr.mxu0 0.0
      %1452 = vmatpush1.msra.mxu0 0.0
      %1453 = vmatprep.subr.mxu0 0.0
      %1454 = vmatpush1.msra.mxu0 0.0
      %1455 = vmatprep.mubr.f32.mxu0 0.0
      %1456 = vmatmul.mubr.f32.gmra.mrb[0].mxu0 %v1389
      %v1457 = vpop.f32.mrb[0].mxu0
      %v1458 = vadd.f32 %v1387, %v1457
      %v1459 = vpop.f32.mrb[0].mxu0
      %1460 = vdwg.mxu0
      %vm1461 = vcmask 9216
      %1462 = vst.msk [vmem:[%s279] sm:$0x3] %vm1461, %v1458
      %p1463 = scmp.lt.s32.totalorder %s16, 3
      %s1464 = scalar_select %p1463, %s16, 3
      %s1465 = smul.addr %s1464, 2
      %s1466 = scalar_lea.vmem %s5, %s1465
      // Predicated region
      $region41: #{gcn_forward.1} parent=39 // pred_check
        %p1467 = pneg %p159
      $region42: #{gcn_forward.1} parent=39 // pred_check_branch
        %1469 = sbr.rel (%p1467) target = $region44
      $region43: #{gcn_forward.1} parent=39 // pred_region
        _
      $region44: #{gcn_forward.1} parent=39 // pred_fallthru
        _
    $region40: #{gcn_forward.1} parent=5 // pred_fallthru
      _
    %p1470 = scmp.le.s32.totalorder 2, %s11
    // Predicated region
    $region45: #{gcn_forward.1} parent=5 // pred_check
      %p1471 = pneg %p1470
    $region46: #{gcn_forward.1} parent=5 // pred_check_branch
      %1473 = sbr.rel (%p1471) target = $region48
    $region47: #{gcn_forward.1} parent=5 // pred_region
      %s1474 = ssub.s32 %s11, 2
      // Predicated region
      $region49: #{gcn_forward.1} parent=47 // pred_check
        %p1475 = pneg %p165
      $region50: #{gcn_forward.1} parent=47 // pred_check_branch
        %1477 = sbr.rel (%p1475) target = $region52
      $region51: #{gcn_forward.1} parent=47 // pred_region
        %p1478 = scmp.lt.s32.totalorder %s17, 3
        %s1479 = scalar_select %p1478, %s17, 3
        %s1480 = smul.addr %s1479, 2
        %s1481 = scalar_lea.vmem %s5, %s1480
      $region52: #{gcn_forward.1} parent=47 // pred_fallthru
        _
    $region48: #{gcn_forward.1} parent=5 // pred_fallthru
      _
  $region6: #{gcn_forward.1} parent=0 // loop_footer
    %s15 = sadd.s32 1, %s11
  $region7: #{gcn_forward.1} parent=0 // loop_footer_branch
    %10 = sbr.rel target = $region3
  $region8: #{gcn_forward.1} parent=0 // loop_exit
    _

</llo_original>
